<compile_context>
chip_gen: v6e
topology: v6e:2x2x1
jax: 0.10.0
libtpu: 0.0.40
codegen_flags: <defaults>
</compile_context>

<pallas_src>
import functools

import jax
import jax.numpy as jnp
from jax.experimental import pallas as pl
from jax.experimental.pallas import tpu as pltpu


def _gelu_tanh(x):
    # tanh-form GELU (max deviation from exact erf-GELU ~1e-3); jnp.tanh
    # lowers to the otherwise-idle EUP instead of a long VALU polynomial.
    c = 0.7978845608028654  # sqrt(2/pi)
    return 0.5 * x * (1.0 + jnp.tanh(c * (x + 0.044715 * (x * x * x))))


def _latent_attention_kernel(
    x_ref, wpq_ref, bpq_ref, kt_ref, v_ref, wo_ref, bo_ref,
    w1_ref, b1_ref, w2_ref, b2_ref,
    out_ref,
    *, num_heads, seq_len,
):
    f32 = jnp.float32
    bf16 = jnp.bfloat16

    x = x_ref[...]                       # [TILE_R, D]   bf16
    kt = kt_ref[...]                     # [H, L]        bf16 (projected latents, transposed)
    v = v_ref[...]                       # [L, H]        bf16 (projected latents)
    wo = wo_ref[...]                     # [H, H]        bf16

    # Fused input_proj + query projection; 1/sqrt(head_dim) already folded
    # into wpq/bpq in the wrapper.
    q = jnp.dot(x, wpq_ref[...], preferred_element_type=f32) + bpq_ref[...]   # [TILE_R, H]

    hidden = q.shape[-1]
    hd = hidden // num_heads

    # Per-head scaled-dot-product attention against the pre-projected latents,
    # accumulating the output projection per head (no lane concat).
    # TODO(synk): at production head counts, switch to a head-batched
    # dot_general with an aligned head_dim instead of this unrolled loop.
    attn = None
    for h in range(num_heads):
        lo, hi = h * hd, (h + 1) * hd
        qh = q[:, lo:hi].astype(bf16)                                    # [TILE_R, hd]
        s = jnp.dot(qh, kt[lo:hi, :], preferred_element_type=f32)        # [TILE_R, L]
        s = s - jnp.max(s, axis=-1, keepdims=True)
        e = jnp.exp(s)
        p = e * pl.reciprocal(jnp.sum(e, axis=-1, keepdims=True), approx=True)
        head = jnp.dot(p.astype(bf16), v[:, lo:hi],
                       preferred_element_type=f32)                       # [TILE_R, hd]
        contrib = jnp.dot(head.astype(bf16), wo[lo:hi, :],
                          preferred_element_type=f32)                    # [TILE_R, H]
        attn = contrib if attn is None else attn + contrib
    o = attn + bo_ref[...]                                               # [TILE_R, H]

    # MLP: Linear -> GELU(tanh) -> Linear (final Linear lane-padded to >=128).
    h1 = jnp.dot(o.astype(bf16), w1_ref[...], preferred_element_type=f32) + b1_ref[...]
    h1 = _gelu_tanh(h1)
    o2 = jnp.dot(h1.astype(bf16), w2_ref[...], preferred_element_type=f32) + b2_ref[...]

    # Mean pool over the sequence: single reshape + sublane reduction.
    tile_b = out_ref.shape[0]
    pooled = jnp.sum(o2.reshape(tile_b, seq_len, o2.shape[-1]), axis=1)
    out_ref[...] = (pooled * (1.0 / float(seq_len))).astype(out_ref.dtype)


def _vmem_limit_bytes():
    # Generation-aware VMEM: ~128 MiB physical on v5e/v6e, 64 MiB on v7x.
    try:
        cap = int(pltpu.get_tpu_info().vmem_capacity_bytes)
    except Exception:
        cap = 64 << 20          # conservative (v7x) fallback
    return int(min(cap * 3 // 4, 100 << 20))


def _choose_tile_b(batch, seq_len, hidden, n_lat, mlp, d_in, d_out_pad,
                   budget_bytes):
    # Rough per-row activation estimate (f32 intermediates + bf16 operands).
    per_row = (4 * (3 * hidden + 2 * n_lat + mlp + d_out_pad)
               + 2 * (2 * d_in + hidden + mlp))
    cap = max(1, batch // 2)    # keep >= 2 grid steps so both v7x TCs get work
    tile_b = 1
    for t in range(1, cap + 1):
        if batch % t == 0 and t * seq_len * per_row <= budget_bytes:
            tile_b = t
    return tile_b


@functools.partial(jax.jit, static_argnames=("num_heads", "tile_b"))
def latent_attention_forward(x, params, num_heads, tile_b=None):
    B, S, D = x.shape
    H = params["wp"].shape[1]
    L = params["lat"].shape[0]
    M = params["w1"].shape[1]
    hd = H // num_heads
    Dp = max(128, ((D + 127) // 128) * 128)   # lane-dense output width

    bf16 = jnp.bfloat16
    scale = 1.0 / float(hd) ** 0.5

    # ---- grid-invariant precompute (f32, once per call, outside the grid) ----
    wpq = (params["wp"] @ params["wq"]) * scale                 # fused input_proj @ q_proj
    bpq = (params["bp"] @ params["wq"] + params["bq"]) * scale  # fused bias (scale folded)
    k = params["lat"] @ params["wk"] + params["bk"]             # [L, H] latent keys
    v = params["lat"] @ params["wv"] + params["bv"]             # [L, H] latent values
    w2p = jnp.pad(params["w2"], ((0, 0), (0, Dp - D)))          # zero-padded output Linear
    b2p = jnp.pad(params["b2"], ((0, 0), (0, Dp - D)))

    operands = [
        wpq.astype(bf16), bpq,
        k.T.astype(bf16),            # [H, L]: per-head slice is a sublane slice
        v.astype(bf16),
        params["wo"].astype(bf16), params["bo"],
        params["w1"].astype(bf16), params["b1"],
        w2p.astype(bf16), b2p,
    ]

    vmem_limit = _vmem_limit_bytes()
    resident_bytes = sum(int(a.size) * a.dtype.itemsize for a in operands)
    # Resident operands are still double-buffered by default (hence the 2x).
    # TODO(synk): pipeline_mode=pl.Buffered(1) on constant-index operands and a
    # K-contraction grid axis for HxH / HxM weights at production dims (v7x).
    budget = max(vmem_limit - 2 * resident_bytes - (4 << 20), 2 << 20)

    if tile_b is None:
        tile_b = _choose_tile_b(B, S, H, L, M, D, Dp, budget)
    assert B % tile_b == 0, "tile_b must divide the batch size"
    n_tiles = B // tile_b
    tile_r = tile_b * S

    # Row tiles are batch-major / seq-minor; the in-kernel pooling reshape
    # relies on this layout.
    x3 = x.astype(bf16).reshape(n_tiles, tile_r, D)

    def resident(a):
        # Full-array block, constant index -> stays VMEM-resident across steps.
        return pl.BlockSpec(a.shape, lambda i, _nd=a.ndim: (0,) * _nd)

    kernel = functools.partial(_latent_attention_kernel,
                               num_heads=num_heads, seq_len=S)

    out = pl.pallas_call(
        kernel,
        grid=(n_tiles,),
        in_specs=[pl.BlockSpec((None, tile_r, D), lambda i: (i, 0, 0))]
                 + [resident(a) for a in operands],
        out_specs=pl.BlockSpec((None, tile_b, Dp), lambda i: (i, 0, 0)),
        out_shape=jax.ShapeDtypeStruct((n_tiles, tile_b, Dp), jnp.float32),
        compiler_params=pltpu.CompilerParams(
            dimension_semantics=("parallel",),   # megacore / 2-TC sharding
            vmem_limit_bytes=vmem_limit,
        ),
    )(x3, *operands)
    return out.reshape(B, Dp)[:, :D]


def init_params(key, input_dim, hidden_dim, num_latents, mlp_dim):
    # Scales roughly follow PyTorch defaults so activations stay O(1).
    ks = jax.random.split(key, 15)

    def nrm(k, shape, scale):
        return scale * jax.random.normal(k, shape, jnp.float32)

    return dict(
        wp=nrm(ks[0], (input_dim, hidden_dim), 0.15),    # input_proj.weight^T
        bp=nrm(ks[1], (1, hidden_dim), 0.05),            # input_proj.bias
        lat=nrm(ks[2], (num_latents, hidden_dim), 1.0),  # latent_array ~ randn
        wq=nrm(ks[3], (hidden_dim, hidden_dim), 0.18),   # in_proj (query) ^T
        bq=nrm(ks[4], (1, hidden_dim), 0.02),
        wk=nrm(ks[5], (hidden_dim, hidden_dim), 0.18),   # in_proj (key) ^T
        bk=nrm(ks[6], (1, hidden_dim), 0.02),
        wv=nrm(ks[7], (hidden_dim, hidden_dim), 0.18),   # in_proj (value) ^T
        bv=nrm(ks[8], (1, hidden_dim), 0.02),
        wo=nrm(ks[9], (hidden_dim, hidden_dim), 0.10),   # out_proj.weight^T
        bo=nrm(ks[10], (1, hidden_dim), 0.05),
        w1=nrm(ks[11], (hidden_dim, mlp_dim), 0.10),     # mlp[0].weight^T
        b1=nrm(ks[12], (1, mlp_dim), 0.05),
        w2=nrm(ks[13], (mlp_dim, input_dim), 0.08),      # mlp[2].weight^T
        b2=nrm(ks[14], (1, input_dim), 0.05),
    )


def reference_forward(x, params, num_heads):
    """Pure-JAX f32 reference mirroring the PyTorch forward (incl. axis quirk)."""
    B, S, D = x.shape
    H = params["wp"].shape[1]
    hd = H // num_heads
    L = params["lat"].shape[0]

    qp = jnp.einsum("bsd,dh->bsh", x, params["wp"]) + params["bp"][0]   # [B,S,H]
    q = jnp.einsum("bsh,hk->bsk", qp, params["wq"]) + params["bq"][0]   # [B,S,H]
    k = params["lat"] @ params["wk"] + params["bk"][0]                  # [L,H]
    v = params["lat"] @ params["wv"] + params["bv"][0]                  # [L,H]

    qh = q.reshape(B, S, num_heads, hd)
    kh = k.reshape(L, num_heads, hd)
    vh = v.reshape(L, num_heads, hd)
    s = jnp.einsum("bsnd,lnd->bsnl", qh, kh) / jnp.sqrt(float(hd))
    p = jax.nn.softmax(s, axis=-1)
    a = jnp.einsum("bsnl,lnd->bsnd", p, vh).reshape(B, S, H)
    o = a @ params["wo"] + params["bo"][0]
    h1 = jax.nn.gelu(o @ params["w1"] + params["b1"][0], approximate=False)
    o2 = h1 @ params["w2"] + params["b2"][0]
    return o2.mean(axis=1)


if __name__ == "__main__":
    B, S = 2, 8
    input_dim, hidden_dim, num_latents, num_heads, mlp_dim = 32, 32, 16, 4, 64

    key = jax.random.PRNGKey(0)
    kx, kp = jax.random.split(key)
    x = jax.random.normal(kx, (B, S, input_dim), jnp.float32)
    params = init_params(kp, input_dim, hidden_dim, num_latents, mlp_dim)

    # tile_b=1 -> grid=(2,): exercises the row-tiled pipeline + parallel axis.
    out = latent_attention_forward(x, params, num_heads=num_heads, tile_b=1)
    out = jax.block_until_ready(out)
    assert out.shape == (B, input_dim)

    ref = reference_forward(x, params, num_heads)
    err = float(jnp.max(jnp.abs(out - ref)))
    # bf16 MXU operands + tanh GELU + approx reciprocal vs exact-f32 reference.
    assert err < 5e-2, f"kernel/reference mismatch: max abs err = {err}"

    print("KERNEL_OK")
</pallas_src>

<mosaic_0001>
module attributes {stable_mosaic.version = 11 : i64} {
  func.func @_latent_attention_kernel(%arg0: i32, %arg1: memref<1x8x32xbf16, #tpu.memory_space<vmem>>, %arg2: memref<32x32xbf16, #tpu.memory_space<vmem>>, %arg3: memref<1x32xf32, #tpu.memory_space<vmem>>, %arg4: memref<32x16xbf16, #tpu.memory_space<vmem>>, %arg5: memref<16x32xbf16, #tpu.memory_space<vmem>>, %arg6: memref<32x32xbf16, #tpu.memory_space<vmem>>, %arg7: memref<1x32xf32, #tpu.memory_space<vmem>>, %arg8: memref<32x64xbf16, #tpu.memory_space<vmem>>, %arg9: memref<1x64xf32, #tpu.memory_space<vmem>>, %arg10: memref<64x128xbf16, #tpu.memory_space<vmem>>, %arg11: memref<1x128xf32, #tpu.memory_space<vmem>>, %arg12: memref<1x1x128xf32, #tpu.memory_space<vmem>>) attributes {dimension_semantics = [#tpu.dimension_semantics<parallel>], iteration_bounds = array<i64: 2>, scalar_prefetch = 0 : i64, scratch_operands = 0 : i64, tpu.core_type = #tpu.core_type<tc>, window_params = [{transform_indices = @transform_0, window_bounds = array<i64: 1, 8, 32>}, {pipeline_mode = #tpu.pipeline_mode<synchronous>, transform_indices = @transform_1, window_bounds = array<i64: 32, 32>}, {pipeline_mode = #tpu.pipeline_mode<synchronous>, transform_indices = @transform_2, window_bounds = array<i64: 1, 32>}, {pipeline_mode = #tpu.pipeline_mode<synchronous>, transform_indices = @transform_3, window_bounds = array<i64: 32, 16>}, {pipeline_mode = #tpu.pipeline_mode<synchronous>, transform_indices = @transform_4, window_bounds = array<i64: 16, 32>}, {pipeline_mode = #tpu.pipeline_mode<synchronous>, transform_indices = @transform_5, window_bounds = array<i64: 32, 32>}, {pipeline_mode = #tpu.pipeline_mode<synchronous>, transform_indices = @transform_6, window_bounds = array<i64: 1, 32>}, {pipeline_mode = #tpu.pipeline_mode<synchronous>, transform_indices = @transform_7, window_bounds = array<i64: 32, 64>}, {pipeline_mode = #tpu.pipeline_mode<synchronous>, transform_indices = @transform_8, window_bounds = array<i64: 1, 64>}, {pipeline_mode = #tpu.pipeline_mode<synchronous>, transform_indices = @transform_9, window_bounds = array<i64: 64, 128>}, {pipeline_mode = #tpu.pipeline_mode<synchronous>, transform_indices = @transform_10, window_bounds = array<i64: 1, 128>}, {transform_indices = @transform_11, window_bounds = array<i64: 1, 1, 128>}]} {
    %c0 = arith.constant 0 : index
    %c0_0 = arith.constant 0 : index
    %c0_1 = arith.constant 0 : index
    %0 = vector.load %arg1[%c0, %c0_0, %c0_1] : memref<1x8x32xbf16, #tpu.memory_space<vmem>>, vector<1x8x32xbf16>
    %1 = vector.shape_cast %0 : vector<1x8x32xbf16> to vector<8x32xbf16>
    %c0_2 = arith.constant 0 : index
    %c0_3 = arith.constant 0 : index
    %2 = vector.load %arg4[%c0_2, %c0_3] : memref<32x16xbf16, #tpu.memory_space<vmem>>, vector<32x16xbf16>
    %c0_4 = arith.constant 0 : index
    %c0_5 = arith.constant 0 : index
    %3 = vector.load %arg5[%c0_4, %c0_5] : memref<16x32xbf16, #tpu.memory_space<vmem>>, vector<16x32xbf16>
    %c0_6 = arith.constant 0 : index
    %c0_7 = arith.constant 0 : index
    %4 = vector.load %arg6[%c0_6, %c0_7] : memref<32x32xbf16, #tpu.memory_space<vmem>>, vector<32x32xbf16>
    %c0_8 = arith.constant 0 : index
    %c0_9 = arith.constant 0 : index
    %5 = vector.load %arg2[%c0_8, %c0_9] : memref<32x32xbf16, #tpu.memory_space<vmem>>, vector<32x32xbf16>
    %cst = arith.constant dense<0.000000e+00> : vector<8x32xf32>
    %6 = tpu.matmul %1, %5, %cst {dimension_numbers = #tpu.dot_dimension_numbers<[1], [0], [0], [1], [0, 0, 1, 1], [], []>} : vector<8x32xbf16>, vector<32x32xbf16>, vector<8x32xf32> -> vector<8x32xf32>
    %c0_10 = arith.constant 0 : index
    %c0_11 = arith.constant 0 : index
    %7 = vector.load %arg3[%c0_10, %c0_11] : memref<1x32xf32, #tpu.memory_space<vmem>>, vector<1x32xf32>
    %8 = vector.broadcast %7 : vector<1x32xf32> to vector<8x32xf32>
    %9 = arith.addf %6, %8 : vector<8x32xf32>
    %10 = vector.extract_strided_slice %9 {offsets = [0, 0], sizes = [8, 8], strides = [1, 1]} : vector<8x32xf32> to vector<8x8xf32>
    %11 = arith.truncf %10 : vector<8x8xf32> to vector<8x8xbf16>
    %12 = vector.extract_strided_slice %2 {offsets = [0, 0], sizes = [8, 16], strides = [1, 1]} : vector<32x16xbf16> to vector<8x16xbf16>
    %cst_12 = arith.constant dense<0.000000e+00> : vector<8x16xf32>
    %13 = tpu.matmul %11, %12, %cst_12 {dimension_numbers = #tpu.dot_dimension_numbers<[1], [0], [0], [1], [0, 0, 1, 1], [], []>} : vector<8x8xbf16>, vector<8x16xbf16>, vector<8x16xf32> -> vector<8x16xf32>
    %cst_13 = arith.constant dense<0xFF800000> : vector<8xf32>
    %14 = vector.multi_reduction <maximumf>, %13, %cst_13 [1] : vector<8x16xf32> to vector<8xf32>
    %15 = vector.shape_cast %14 : vector<8xf32> to vector<8x1xf32>
    %16 = vector.broadcast %15 : vector<8x1xf32> to vector<8x16xf32>
    %17 = arith.subf %13, %16 : vector<8x16xf32>
    %18 = math.exp %17 : vector<8x16xf32>
    %cst_14 = arith.constant dense<0.000000e+00> : vector<8xf32>
    %19 = vector.multi_reduction <add>, %18, %cst_14 [1] : vector<8x16xf32> to vector<8xf32>
    %20 = vector.shape_cast %19 : vector<8xf32> to vector<8x1xf32>
    %21 = tpu.reciprocal %20 {approx = true} : vector<8x1xf32> -> vector<8x1xf32>
    %22 = vector.broadcast %21 : vector<8x1xf32> to vector<8x16xf32>
    %23 = arith.mulf %18, %22 : vector<8x16xf32>
    %24 = arith.truncf %23 : vector<8x16xf32> to vector<8x16xbf16>
    %25 = vector.extract_strided_slice %3 {offsets = [0, 0], sizes = [16, 8], strides = [1, 1]} : vector<16x32xbf16> to vector<16x8xbf16>
    %cst_15 = arith.constant dense<0.000000e+00> : vector<8x8xf32>
    %26 = tpu.matmul %24, %25, %cst_15 {dimension_numbers = #tpu.dot_dimension_numbers<[1], [0], [0], [1], [0, 0, 1, 1], [], []>} : vector<8x16xbf16>, vector<16x8xbf16>, vector<8x8xf32> -> vector<8x8xf32>
    %27 = arith.truncf %26 : vector<8x8xf32> to vector<8x8xbf16>
    %28 = vector.extract_strided_slice %4 {offsets = [0, 0], sizes = [8, 32], strides = [1, 1]} : vector<32x32xbf16> to vector<8x32xbf16>
    %cst_16 = arith.constant dense<0.000000e+00> : vector<8x32xf32>
    %29 = tpu.matmul %27, %28, %cst_16 {dimension_numbers = #tpu.dot_dimension_numbers<[1], [0], [0], [1], [0, 0, 1, 1], [], []>} : vector<8x8xbf16>, vector<8x32xbf16>, vector<8x32xf32> -> vector<8x32xf32>
    %30 = vector.extract_strided_slice %9 {offsets = [0, 8], sizes = [8, 8], strides = [1, 1]} : vector<8x32xf32> to vector<8x8xf32>
    %31 = arith.truncf %30 : vector<8x8xf32> to vector<8x8xbf16>
    %32 = vector.extract_strided_slice %2 {offsets = [8, 0], sizes = [8, 16], strides = [1, 1]} : vector<32x16xbf16> to vector<8x16xbf16>
    %cst_17 = arith.constant dense<0.000000e+00> : vector<8x16xf32>
    %33 = tpu.matmul %31, %32, %cst_17 {dimension_numbers = #tpu.dot_dimension_numbers<[1], [0], [0], [1], [0, 0, 1, 1], [], []>} : vector<8x8xbf16>, vector<8x16xbf16>, vector<8x16xf32> -> vector<8x16xf32>
    %cst_18 = arith.constant dense<0xFF800000> : vector<8xf32>
    %34 = vector.multi_reduction <maximumf>, %33, %cst_18 [1] : vector<8x16xf32> to vector<8xf32>
    %35 = vector.shape_cast %34 : vector<8xf32> to vector<8x1xf32>
    %36 = vector.broadcast %35 : vector<8x1xf32> to vector<8x16xf32>
    %37 = arith.subf %33, %36 : vector<8x16xf32>
    %38 = math.exp %37 : vector<8x16xf32>
    %cst_19 = arith.constant dense<0.000000e+00> : vector<8xf32>
    %39 = vector.multi_reduction <add>, %38, %cst_19 [1] : vector<8x16xf32> to vector<8xf32>
    %40 = vector.shape_cast %39 : vector<8xf32> to vector<8x1xf32>
    %41 = tpu.reciprocal %40 {approx = true} : vector<8x1xf32> -> vector<8x1xf32>
    %42 = vector.broadcast %41 : vector<8x1xf32> to vector<8x16xf32>
    %43 = arith.mulf %38, %42 : vector<8x16xf32>
    %44 = arith.truncf %43 : vector<8x16xf32> to vector<8x16xbf16>
    %45 = vector.extract_strided_slice %3 {offsets = [0, 8], sizes = [16, 8], strides = [1, 1]} : vector<16x32xbf16> to vector<16x8xbf16>
    %cst_20 = arith.constant dense<0.000000e+00> : vector<8x8xf32>
    %46 = tpu.matmul %44, %45, %cst_20 {dimension_numbers = #tpu.dot_dimension_numbers<[1], [0], [0], [1], [0, 0, 1, 1], [], []>} : vector<8x16xbf16>, vector<16x8xbf16>, vector<8x8xf32> -> vector<8x8xf32>
    %47 = arith.truncf %46 : vector<8x8xf32> to vector<8x8xbf16>
    %48 = vector.extract_strided_slice %4 {offsets = [8, 0], sizes = [8, 32], strides = [1, 1]} : vector<32x32xbf16> to vector<8x32xbf16>
    %cst_21 = arith.constant dense<0.000000e+00> : vector<8x32xf32>
    %49 = tpu.matmul %47, %48, %cst_21 {dimension_numbers = #tpu.dot_dimension_numbers<[1], [0], [0], [1], [0, 0, 1, 1], [], []>} : vector<8x8xbf16>, vector<8x32xbf16>, vector<8x32xf32> -> vector<8x32xf32>
    %50 = arith.addf %29, %49 : vector<8x32xf32>
    %51 = vector.extract_strided_slice %9 {offsets = [0, 16], sizes = [8, 8], strides = [1, 1]} : vector<8x32xf32> to vector<8x8xf32>
    %52 = arith.truncf %51 : vector<8x8xf32> to vector<8x8xbf16>
    %53 = vector.extract_strided_slice %2 {offsets = [16, 0], sizes = [8, 16], strides = [1, 1]} : vector<32x16xbf16> to vector<8x16xbf16>
    %cst_22 = arith.constant dense<0.000000e+00> : vector<8x16xf32>
    %54 = tpu.matmul %52, %53, %cst_22 {dimension_numbers = #tpu.dot_dimension_numbers<[1], [0], [0], [1], [0, 0, 1, 1], [], []>} : vector<8x8xbf16>, vector<8x16xbf16>, vector<8x16xf32> -> vector<8x16xf32>
    %cst_23 = arith.constant dense<0xFF800000> : vector<8xf32>
    %55 = vector.multi_reduction <maximumf>, %54, %cst_23 [1] : vector<8x16xf32> to vector<8xf32>
    %56 = vector.shape_cast %55 : vector<8xf32> to vector<8x1xf32>
    %57 = vector.broadcast %56 : vector<8x1xf32> to vector<8x16xf32>
    %58 = arith.subf %54, %57 : vector<8x16xf32>
    %59 = math.exp %58 : vector<8x16xf32>
    %cst_24 = arith.constant dense<0.000000e+00> : vector<8xf32>
    %60 = vector.multi_reduction <add>, %59, %cst_24 [1] : vector<8x16xf32> to vector<8xf32>
    %61 = vector.shape_cast %60 : vector<8xf32> to vector<8x1xf32>
    %62 = tpu.reciprocal %61 {approx = true} : vector<8x1xf32> -> vector<8x1xf32>
    %63 = vector.broadcast %62 : vector<8x1xf32> to vector<8x16xf32>
    %64 = arith.mulf %59, %63 : vector<8x16xf32>
    %65 = arith.truncf %64 : vector<8x16xf32> to vector<8x16xbf16>
    %66 = vector.extract_strided_slice %3 {offsets = [0, 16], sizes = [16, 8], strides = [1, 1]} : vector<16x32xbf16> to vector<16x8xbf16>
    %cst_25 = arith.constant dense<0.000000e+00> : vector<8x8xf32>
    %67 = tpu.matmul %65, %66, %cst_25 {dimension_numbers = #tpu.dot_dimension_numbers<[1], [0], [0], [1], [0, 0, 1, 1], [], []>} : vector<8x16xbf16>, vector<16x8xbf16>, vector<8x8xf32> -> vector<8x8xf32>
    %68 = arith.truncf %67 : vector<8x8xf32> to vector<8x8xbf16>
    %69 = vector.extract_strided_slice %4 {offsets = [16, 0], sizes = [8, 32], strides = [1, 1]} : vector<32x32xbf16> to vector<8x32xbf16>
    %cst_26 = arith.constant dense<0.000000e+00> : vector<8x32xf32>
    %70 = tpu.matmul %68, %69, %cst_26 {dimension_numbers = #tpu.dot_dimension_numbers<[1], [0], [0], [1], [0, 0, 1, 1], [], []>} : vector<8x8xbf16>, vector<8x32xbf16>, vector<8x32xf32> -> vector<8x32xf32>
    %71 = arith.addf %50, %70 : vector<8x32xf32>
    %72 = vector.extract_strided_slice %9 {offsets = [0, 24], sizes = [8, 8], strides = [1, 1]} : vector<8x32xf32> to vector<8x8xf32>
    %73 = arith.truncf %72 : vector<8x8xf32> to vector<8x8xbf16>
    %74 = vector.extract_strided_slice %2 {offsets = [24, 0], sizes = [8, 16], strides = [1, 1]} : vector<32x16xbf16> to vector<8x16xbf16>
    %cst_27 = arith.constant dense<0.000000e+00> : vector<8x16xf32>
    %75 = tpu.matmul %73, %74, %cst_27 {dimension_numbers = #tpu.dot_dimension_numbers<[1], [0], [0], [1], [0, 0, 1, 1], [], []>} : vector<8x8xbf16>, vector<8x16xbf16>, vector<8x16xf32> -> vector<8x16xf32>
    %cst_28 = arith.constant dense<0xFF800000> : vector<8xf32>
    %76 = vector.multi_reduction <maximumf>, %75, %cst_28 [1] : vector<8x16xf32> to vector<8xf32>
    %77 = vector.shape_cast %76 : vector<8xf32> to vector<8x1xf32>
    %78 = vector.broadcast %77 : vector<8x1xf32> to vector<8x16xf32>
    %79 = arith.subf %75, %78 : vector<8x16xf32>
    %80 = math.exp %79 : vector<8x16xf32>
    %cst_29 = arith.constant dense<0.000000e+00> : vector<8xf32>
    %81 = vector.multi_reduction <add>, %80, %cst_29 [1] : vector<8x16xf32> to vector<8xf32>
    %82 = vector.shape_cast %81 : vector<8xf32> to vector<8x1xf32>
    %83 = tpu.reciprocal %82 {approx = true} : vector<8x1xf32> -> vector<8x1xf32>
    %84 = vector.broadcast %83 : vector<8x1xf32> to vector<8x16xf32>
    %85 = arith.mulf %80, %84 : vector<8x16xf32>
    %86 = arith.truncf %85 : vector<8x16xf32> to vector<8x16xbf16>
    %87 = vector.extract_strided_slice %3 {offsets = [0, 24], sizes = [16, 8], strides = [1, 1]} : vector<16x32xbf16> to vector<16x8xbf16>
    %cst_30 = arith.constant dense<0.000000e+00> : vector<8x8xf32>
    %88 = tpu.matmul %86, %87, %cst_30 {dimension_numbers = #tpu.dot_dimension_numbers<[1], [0], [0], [1], [0, 0, 1, 1], [], []>} : vector<8x16xbf16>, vector<16x8xbf16>, vector<8x8xf32> -> vector<8x8xf32>
    %89 = arith.truncf %88 : vector<8x8xf32> to vector<8x8xbf16>
    %90 = vector.extract_strided_slice %4 {offsets = [24, 0], sizes = [8, 32], strides = [1, 1]} : vector<32x32xbf16> to vector<8x32xbf16>
    %cst_31 = arith.constant dense<0.000000e+00> : vector<8x32xf32>
    %91 = tpu.matmul %89, %90, %cst_31 {dimension_numbers = #tpu.dot_dimension_numbers<[1], [0], [0], [1], [0, 0, 1, 1], [], []>} : vector<8x8xbf16>, vector<8x32xbf16>, vector<8x32xf32> -> vector<8x32xf32>
    %92 = arith.addf %71, %91 : vector<8x32xf32>
    %c0_32 = arith.constant 0 : index
    %c0_33 = arith.constant 0 : index
    %93 = vector.load %arg7[%c0_32, %c0_33] : memref<1x32xf32, #tpu.memory_space<vmem>>, vector<1x32xf32>
    %94 = vector.broadcast %93 : vector<1x32xf32> to vector<8x32xf32>
    %95 = arith.addf %92, %94 : vector<8x32xf32>
    %96 = arith.truncf %95 : vector<8x32xf32> to vector<8x32xbf16>
    %c0_34 = arith.constant 0 : index
    %c0_35 = arith.constant 0 : index
    %97 = vector.load %arg8[%c0_34, %c0_35] : memref<32x64xbf16, #tpu.memory_space<vmem>>, vector<32x64xbf16>
    %cst_36 = arith.constant dense<0.000000e+00> : vector<8x64xf32>
    %98 = tpu.matmul %96, %97, %cst_36 {dimension_numbers = #tpu.dot_dimension_numbers<[1], [0], [0], [1], [0, 0, 1, 1], [], []>} : vector<8x32xbf16>, vector<32x64xbf16>, vector<8x64xf32> -> vector<8x64xf32>
    %c0_37 = arith.constant 0 : index
    %c0_38 = arith.constant 0 : index
    %99 = vector.load %arg9[%c0_37, %c0_38] : memref<1x64xf32, #tpu.memory_space<vmem>>, vector<1x64xf32>
    %100 = vector.broadcast %99 : vector<1x64xf32> to vector<8x64xf32>
    %101 = arith.addf %98, %100 : vector<8x64xf32>
    %cst_39 = arith.constant 5.000000e-01 : f32
    %102 = vector.broadcast %cst_39 : f32 to vector<8x64xf32>
    %103 = arith.mulf %102, %101 : vector<8x64xf32>
    %104 = arith.mulf %101, %101 : vector<8x64xf32>
    %105 = arith.mulf %104, %101 : vector<8x64xf32>
    %cst_40 = arith.constant 4.471500e-02 : f32
    %106 = vector.broadcast %cst_40 : f32 to vector<8x64xf32>
    %107 = arith.mulf %106, %105 : vector<8x64xf32>
    %108 = arith.addf %101, %107 : vector<8x64xf32>
    %cst_41 = arith.constant 0.797884583 : f32
    %109 = vector.broadcast %cst_41 : f32 to vector<8x64xf32>
    %110 = arith.mulf %109, %108 : vector<8x64xf32>
    %111 = math.tanh %110 : vector<8x64xf32>
    %cst_42 = arith.constant 1.000000e+00 : f32
    %112 = vector.broadcast %cst_42 : f32 to vector<8x64xf32>
    %113 = arith.addf %112, %111 : vector<8x64xf32>
    %114 = arith.mulf %103, %113 : vector<8x64xf32>
    %115 = arith.truncf %114 : vector<8x64xf32> to vector<8x64xbf16>
    %c0_43 = arith.constant 0 : index
    %c0_44 = arith.constant 0 : index
    %116 = vector.load %arg10[%c0_43, %c0_44] : memref<64x128xbf16, #tpu.memory_space<vmem>>, vector<64x128xbf16>
    %cst_45 = arith.constant dense<0.000000e+00> : vector<8x128xf32>
    %117 = tpu.matmul %115, %116, %cst_45 {dimension_numbers = #tpu.dot_dimension_numbers<[1], [0], [0], [1], [0, 0, 1, 1], [], []>} : vector<8x64xbf16>, vector<64x128xbf16>, vector<8x128xf32> -> vector<8x128xf32>
    %c0_46 = arith.constant 0 : index
    %c0_47 = arith.constant 0 : index
    %118 = vector.load %arg11[%c0_46, %c0_47] : memref<1x128xf32, #tpu.memory_space<vmem>>, vector<1x128xf32>
    %119 = vector.broadcast %118 : vector<1x128xf32> to vector<8x128xf32>
    %120 = arith.addf %117, %119 : vector<8x128xf32>
    %121 = vector.shape_cast %120 : vector<8x128xf32> to vector<1x8x128xf32>
    %cst_48 = arith.constant dense<0.000000e+00> : vector<1x128xf32>
    %122 = vector.multi_reduction <add>, %121, %cst_48 [1] : vector<1x8x128xf32> to vector<1x128xf32>
    %cst_49 = arith.constant 1.250000e-01 : f32
    %123 = vector.broadcast %cst_49 : f32 to vector<1x128xf32>
    %124 = arith.mulf %122, %123 : vector<1x128xf32>
    %c0_50 = arith.constant 0 : index
    %c0_51 = arith.constant 0 : index
    %c0_52 = arith.constant 0 : index
    %125 = vector.load %arg12[%c0_50, %c0_51, %c0_52] : memref<1x1x128xf32, #tpu.memory_space<vmem>>, vector<1x1x128xf32>
    %126 = vector.shape_cast %125 : vector<1x1x128xf32> to vector<1x128xf32>
    %127 = vector.shape_cast %124 : vector<1x128xf32> to vector<1x1x128xf32>
    tpu.vector_store %arg12[%c0_50, %c0_51, %c0_52], %127 {strides = array<i32>} : memref<1x1x128xf32, #tpu.memory_space<vmem>>, vector<1x1x128xf32>,
    return
  }
  func.func @transform_0(%arg0: i32) -> (i32, i32, i32) {
    %c0_i32 = arith.constant 0 : i32
    %c0_i32_0 = arith.constant 0 : i32
    %c0_i32_1 = arith.constant 0 : i32
    return %arg0, %c0_i32, %c0_i32_0 : i32, i32, i32
  }
  func.func @transform_1(%arg0: i32) -> (i32, i32) {
    %c0_i32 = arith.constant 0 : i32
    %c0_i32_0 = arith.constant 0 : i32
    %c0_i32_1 = arith.constant 0 : i32
    return %c0_i32, %c0_i32_0 : i32, i32
  }
  func.func @transform_2(%arg0: i32) -> (i32, i32) {
    %c0_i32 = arith.constant 0 : i32
    %c0_i32_0 = arith.constant 0 : i32
    %c0_i32_1 = arith.constant 0 : i32
    return %c0_i32, %c0_i32_0 : i32, i32
  }
  func.func @transform_3(%arg0: i32) -> (i32, i32) {
    %c0_i32 = arith.constant 0 : i32
    %c0_i32_0 = arith.constant 0 : i32
    %c0_i32_1 = arith.constant 0 : i32
    return %c0_i32, %c0_i32_0 : i32, i32
  }
  func.func @transform_4(%arg0: i32) -> (i32, i32) {
    %c0_i32 = arith.constant 0 : i32
    %c0_i32_0 = arith.constant 0 : i32
    %c0_i32_1 = arith.constant 0 : i32
    return %c0_i32, %c0_i32_0 : i32, i32
  }
  func.func @transform_5(%arg0: i32) -> (i32, i32) {
    %c0_i32 = arith.constant 0 : i32
    %c0_i32_0 = arith.constant 0 : i32
    %c0_i32_1 = arith.constant 0 : i32
    return %c0_i32, %c0_i32_0 : i32, i32
  }
  func.func @transform_6(%arg0: i32) -> (i32, i32) {
    %c0_i32 = arith.constant 0 : i32
    %c0_i32_0 = arith.constant 0 : i32
    %c0_i32_1 = arith.constant 0 : i32
    return %c0_i32, %c0_i32_0 : i32, i32
  }
  func.func @transform_7(%arg0: i32) -> (i32, i32) {
    %c0_i32 = arith.constant 0 : i32
    %c0_i32_0 = arith.constant 0 : i32
    %c0_i32_1 = arith.constant 0 : i32
    return %c0_i32, %c0_i32_0 : i32, i32
  }
  func.func @transform_8(%arg0: i32) -> (i32, i32) {
    %c0_i32 = arith.constant 0 : i32
    %c0_i32_0 = arith.constant 0 : i32
    %c0_i32_1 = arith.constant 0 : i32
    return %c0_i32, %c0_i32_0 : i32, i32
  }
  func.func @transform_9(%arg0: i32) -> (i32, i32) {
    %c0_i32 = arith.constant 0 : i32
    %c0_i32_0 = arith.constant 0 : i32
    %c0_i32_1 = arith.constant 0 : i32
    return %c0_i32, %c0_i32_0 : i32, i32
  }
  func.func @transform_10(%arg0: i32) -> (i32, i32) {
    %c0_i32 = arith.constant 0 : i32
    %c0_i32_0 = arith.constant 0 : i32
    %c0_i32_1 = arith.constant 0 : i32
    return %c0_i32, %c0_i32_0 : i32, i32
  }
  func.func @transform_11(%arg0: i32) -> (i32, i32, i32) {
    %c0_i32 = arith.constant 0 : i32
    %c0_i32_0 = arith.constant 0 : i32
    %c0_i32_1 = arith.constant 0 : i32
    return %arg0, %c0_i32, %c0_i32_0 : i32, i32, i32
  }
}

</mosaic_0001>

<llo_original>
// kernel: latent_attention_forward.1
$region0: #{latent_attention_forward.1}
  #allocation0 [shape = 'u32[]', space=smem, size = 0x4, offset = 0x4, fixed_abs, tag = 'smem constant byte address 0x4 - core index']
  #allocation1 [shape = 'u32[144,128]{1,0:T(1,128)}', space=vmem, size = 0x12000, scoped, tag = 'internal scratch']
  %s0 = inlined_call_operand.vmem [shape: bf16[2,8,32], index: 0, kind: input, shape index: {}]
  %s1 = inlined_call_operand.vmem [shape: bf16[32,32], index: 1, kind: input, shape index: {}]
  %s2 = inlined_call_operand.vmem [shape: f32[1,32], index: 2, kind: input, shape index: {}]
  %s3 = inlined_call_operand.vmem [shape: bf16[32,16], index: 3, kind: input, shape index: {}]
  %s4 = inlined_call_operand.vmem [shape: bf16[16,32], index: 4, kind: input, shape index: {}]
  %s5 = inlined_call_operand.vmem [shape: bf16[32,32], index: 5, kind: input, shape index: {}]
  %s6 = inlined_call_operand.vmem [shape: f32[1,32], index: 6, kind: input, shape index: {}]
  %s7 = inlined_call_operand.vmem [shape: bf16[32,64], index: 7, kind: input, shape index: {}]
  %s8 = inlined_call_operand.vmem [shape: f32[1,64], index: 8, kind: input, shape index: {}]
  %s9 = inlined_call_operand.vmem [shape: bf16[64,128], index: 9, kind: input, shape index: {}]
  %s10 = inlined_call_operand.vmem [shape: f32[1,128], index: 10, kind: input, shape index: {}]
  %s11 = inlined_call_operand.hbm [shape: f32[2,1,128], index: 11, kind: output, shape index: {}]
  %s12 = sld [smem:[#allocation0]]
  $region77: #{latent_attention_forward.1} parent=0
    _
  %s14 = ssub.s32 1, %s12
  %s15 = scalar_select 0, %s14, %s12
  $region1: #{latent_attention_forward.1} parent=0
    #allocation2 [shape = 'u8[1024]{0}', space=vmem, size = 0x400, scoped, tag = 'output window, operand 0']
    #allocation3 [shape = 's32[2]{0}', space=sflag, size = 0x8, scoped, tag = 'scoped memory for latent_attention_forward.1']
    %16 = vsyncpa [#allocation3], 0
    %s17 = scalar_lea.sflag [#allocation3], 1
    %18 = vsyncpa %s17, 0
    loop: start=0, step=1, limit=4
    $region2: #{latent_attention_forward.1} parent=1 // loop_pre_header
      _
    $region3: #{latent_attention_forward.1} parent=1 // loop_header
      %s20 = sphi 0, %s24
      %p21 = scmp.ge.s32.totalorder %s20, 4
      %s30 = sphi 0, %s32
      %s33 = sphi 0, %s30
      %s34 = sphi 0, %s33
      %s50 = sphi 0, %s34
      %s54 = sphi 0, %s54
      %s56 = sphi 0, %s54
      %s57 = sphi 0, %s56
      %s71 = sphi 0, %s57
      %s75 = sphi 0, %s75
      %s77 = sphi 0, %s75
      %s78 = sphi 0, %s77
      %s92 = sphi 0, %s78
      %s96 = sphi 0, %s96
      %s98 = sphi 0, %s96
      %s99 = sphi 0, %s98
      %s113 = sphi 0, %s99
      %s117 = sphi 0, %s117
      %s119 = sphi 0, %s117
      %s120 = sphi 0, %s119
      %s134 = sphi 0, %s120
      %s138 = sphi 0, %s138
      %s140 = sphi 0, %s138
      %s141 = sphi 0, %s140
      %s155 = sphi 0, %s141
      %s159 = sphi 0, %s159
      %s161 = sphi 0, %s159
      %s162 = sphi 0, %s161
      %s176 = sphi 0, %s162
      %s180 = sphi 0, %s180
      %s182 = sphi 0, %s180
      %s183 = sphi 0, %s182
      %s197 = sphi 0, %s183
      %s201 = sphi 0, %s201
      %s203 = sphi 0, %s201
      %s204 = sphi 0, %s203
      %s218 = sphi 0, %s204
      %s222 = sphi 0, %s222
      %s224 = sphi 0, %s222
      %s225 = sphi 0, %s224
      %s239 = sphi 0, %s225
      %s243 = sphi 0, %s243
      %s245 = sphi 0, %s243
      %s246 = sphi 0, %s245
      %s260 = sphi 0, %s246
      %s266 = sphi 0, %s268
      %s269 = sphi 0, %s266
      %s270 = sphi 0, %s269
      %s286 = sphi 0, %s270
    $region4: #{latent_attention_forward.1} parent=1 // loop_header_branch
      %23 = sbr.rel (%p21) target = $region8
    $region5: #{latent_attention_forward.1} parent=1 // loop_body
      %s25 = ssub.s32 %s20, 1
      %s26 = ssub.s32 %s20, 2
      %s27 = sadd.s32 %s20, 1
      %s28 = ssub.s32 %s20, %s27
      %p29 = scmp.eq.s32.totalorder %s28, 0
      %s31 = sadd.s32 %s30, 1
      %s32 = scalar_select %p29, %s30, %s31
      %p35 = pneg %p29
      %p36 = scmp.eq.s32.totalorder %s20, 1
      %p37 = por %p35, %p36
      %p38 = scmp.ne.s32.totalorder %s30, %s33
      %p39 = scmp.eq.s32.totalorder %s20, 0
      %p40 = por %p38, %p39
      %p41 = scmp.ne.s32.totalorder %s30, %s33
      %p42 = scmp.eq.s32.totalorder %s25, 1
      %p43 = por %p41, %p42
      %p44 = scmp.ne.s32.totalorder %s33, %s34
      %p45 = scmp.eq.s32.totalorder %s25, 0
      %p46 = por %p44, %p45
      %p47 = scmp.ne.s32.totalorder %s33, %s34
      %p48 = scmp.eq.s32.totalorder %s26, 1
      %p49 = por %p47, %p48
      %p51 = scmp.ne.s32.totalorder %s34, %s50
      %p52 = scmp.eq.s32.totalorder %s26, 0
      %p53 = por %p51, %p52
      %s55 = sadd.s32 %s54, 1
      %p58 = scmp.eq.s32.totalorder %s20, 1
      %p59 = scmp.ne.s32.totalorder %s54, %s56
      %p60 = scmp.eq.s32.totalorder %s20, 0
      %p61 = por %p59, %p60
      %p62 = scmp.ne.s32.totalorder %s54, %s56
      %p63 = scmp.eq.s32.totalorder %s25, 1
      %p64 = por %p62, %p63
      %p65 = scmp.ne.s32.totalorder %s56, %s57
      %p66 = scmp.eq.s32.totalorder %s25, 0
      %p67 = por %p65, %p66
      %p68 = scmp.ne.s32.totalorder %s56, %s57
      %p69 = scmp.eq.s32.totalorder %s26, 1
      %p70 = por %p68, %p69
      %p72 = scmp.ne.s32.totalorder %s57, %s71
      %p73 = scmp.eq.s32.totalorder %s26, 0
      %p74 = por %p72, %p73
      %s76 = sadd.s32 %s75, 1
      %p79 = scmp.eq.s32.totalorder %s20, 1
      %p80 = scmp.ne.s32.totalorder %s75, %s77
      %p81 = scmp.eq.s32.totalorder %s20, 0
      %p82 = por %p80, %p81
      %p83 = scmp.ne.s32.totalorder %s75, %s77
      %p84 = scmp.eq.s32.totalorder %s25, 1
      %p85 = por %p83, %p84
      %p86 = scmp.ne.s32.totalorder %s77, %s78
      %p87 = scmp.eq.s32.totalorder %s25, 0
      %p88 = por %p86, %p87
      %p89 = scmp.ne.s32.totalorder %s77, %s78
      %p90 = scmp.eq.s32.totalorder %s26, 1
      %p91 = por %p89, %p90
      %p93 = scmp.ne.s32.totalorder %s78, %s92
      %p94 = scmp.eq.s32.totalorder %s26, 0
      %p95 = por %p93, %p94
      %s97 = sadd.s32 %s96, 1
      %p100 = scmp.eq.s32.totalorder %s20, 1
      %p101 = scmp.ne.s32.totalorder %s96, %s98
      %p102 = scmp.eq.s32.totalorder %s20, 0
      %p103 = por %p101, %p102
      %p104 = scmp.ne.s32.totalorder %s96, %s98
      %p105 = scmp.eq.s32.totalorder %s25, 1
      %p106 = por %p104, %p105
      %p107 = scmp.ne.s32.totalorder %s98, %s99
      %p108 = scmp.eq.s32.totalorder %s25, 0
      %p109 = por %p107, %p108
      %p110 = scmp.ne.s32.totalorder %s98, %s99
      %p111 = scmp.eq.s32.totalorder %s26, 1
      %p112 = por %p110, %p111
      %p114 = scmp.ne.s32.totalorder %s99, %s113
      %p115 = scmp.eq.s32.totalorder %s26, 0
      %p116 = por %p114, %p115
      %s118 = sadd.s32 %s117, 1
      %p121 = scmp.eq.s32.totalorder %s20, 1
      %p122 = scmp.ne.s32.totalorder %s117, %s119
      %p123 = scmp.eq.s32.totalorder %s20, 0
      %p124 = por %p122, %p123
      %p125 = scmp.ne.s32.totalorder %s117, %s119
      %p126 = scmp.eq.s32.totalorder %s25, 1
      %p127 = por %p125, %p126
      %p128 = scmp.ne.s32.totalorder %s119, %s120
      %p129 = scmp.eq.s32.totalorder %s25, 0
      %p130 = por %p128, %p129
      %p131 = scmp.ne.s32.totalorder %s119, %s120
      %p132 = scmp.eq.s32.totalorder %s26, 1
      %p133 = por %p131, %p132
      %p135 = scmp.ne.s32.totalorder %s120, %s134
      %p136 = scmp.eq.s32.totalorder %s26, 0
      %p137 = por %p135, %p136
      %s139 = sadd.s32 %s138, 1
      %p142 = scmp.eq.s32.totalorder %s20, 1
      %p143 = scmp.ne.s32.totalorder %s138, %s140
      %p144 = scmp.eq.s32.totalorder %s20, 0
      %p145 = por %p143, %p144
      %p146 = scmp.ne.s32.totalorder %s138, %s140
      %p147 = scmp.eq.s32.totalorder %s25, 1
      %p148 = por %p146, %p147
      %p149 = scmp.ne.s32.totalorder %s140, %s141
      %p150 = scmp.eq.s32.totalorder %s25, 0
      %p151 = por %p149, %p150
      %p152 = scmp.ne.s32.totalorder %s140, %s141
      %p153 = scmp.eq.s32.totalorder %s26, 1
      %p154 = por %p152, %p153
      %p156 = scmp.ne.s32.totalorder %s141, %s155
      %p157 = scmp.eq.s32.totalorder %s26, 0
      %p158 = por %p156, %p157
      %s160 = sadd.s32 %s159, 1
      %p163 = scmp.eq.s32.totalorder %s20, 1
      %p164 = scmp.ne.s32.totalorder %s159, %s161
      %p165 = scmp.eq.s32.totalorder %s20, 0
      %p166 = por %p164, %p165
      %p167 = scmp.ne.s32.totalorder %s159, %s161
      %p168 = scmp.eq.s32.totalorder %s25, 1
      %p169 = por %p167, %p168
      %p170 = scmp.ne.s32.totalorder %s161, %s162
      %p171 = scmp.eq.s32.totalorder %s25, 0
      %p172 = por %p170, %p171
      %p173 = scmp.ne.s32.totalorder %s161, %s162
      %p174 = scmp.eq.s32.totalorder %s26, 1
      %p175 = por %p173, %p174
      %p177 = scmp.ne.s32.totalorder %s162, %s176
      %p178 = scmp.eq.s32.totalorder %s26, 0
      %p179 = por %p177, %p178
      %s181 = sadd.s32 %s180, 1
      %p184 = scmp.eq.s32.totalorder %s20, 1
      %p185 = scmp.ne.s32.totalorder %s180, %s182
      %p186 = scmp.eq.s32.totalorder %s20, 0
      %p187 = por %p185, %p186
      %p188 = scmp.ne.s32.totalorder %s180, %s182
      %p189 = scmp.eq.s32.totalorder %s25, 1
      %p190 = por %p188, %p189
      %p191 = scmp.ne.s32.totalorder %s182, %s183
      %p192 = scmp.eq.s32.totalorder %s25, 0
      %p193 = por %p191, %p192
      %p194 = scmp.ne.s32.totalorder %s182, %s183
      %p195 = scmp.eq.s32.totalorder %s26, 1
      %p196 = por %p194, %p195
      %p198 = scmp.ne.s32.totalorder %s183, %s197
      %p199 = scmp.eq.s32.totalorder %s26, 0
      %p200 = por %p198, %p199
      %s202 = sadd.s32 %s201, 1
      %p205 = scmp.eq.s32.totalorder %s20, 1
      %p206 = scmp.ne.s32.totalorder %s201, %s203
      %p207 = scmp.eq.s32.totalorder %s20, 0
      %p208 = por %p206, %p207
      %p209 = scmp.ne.s32.totalorder %s201, %s203
      %p210 = scmp.eq.s32.totalorder %s25, 1
      %p211 = por %p209, %p210
      %p212 = scmp.ne.s32.totalorder %s203, %s204
      %p213 = scmp.eq.s32.totalorder %s25, 0
      %p214 = por %p212, %p213
      %p215 = scmp.ne.s32.totalorder %s203, %s204
      %p216 = scmp.eq.s32.totalorder %s26, 1
      %p217 = por %p215, %p216
      %p219 = scmp.ne.s32.totalorder %s204, %s218
      %p220 = scmp.eq.s32.totalorder %s26, 0
      %p221 = por %p219, %p220
      %s223 = sadd.s32 %s222, 1
      %p226 = scmp.eq.s32.totalorder %s20, 1
      %p227 = scmp.ne.s32.totalorder %s222, %s224
      %p228 = scmp.eq.s32.totalorder %s20, 0
      %p229 = por %p227, %p228
      %p230 = scmp.ne.s32.totalorder %s222, %s224
      %p231 = scmp.eq.s32.totalorder %s25, 1
      %p232 = por %p230, %p231
      %p233 = scmp.ne.s32.totalorder %s224, %s225
      %p234 = scmp.eq.s32.totalorder %s25, 0
      %p235 = por %p233, %p234
      %p236 = scmp.ne.s32.totalorder %s224, %s225
      %p237 = scmp.eq.s32.totalorder %s26, 1
      %p238 = por %p236, %p237
      %p240 = scmp.ne.s32.totalorder %s225, %s239
      %p241 = scmp.eq.s32.totalorder %s26, 0
      %p242 = por %p240, %p241
      %s244 = sadd.s32 %s243, 1
      %p247 = scmp.eq.s32.totalorder %s20, 1
      %p248 = scmp.ne.s32.totalorder %s243, %s245
      %p249 = scmp.eq.s32.totalorder %s20, 0
      %p250 = por %p248, %p249
      %p251 = scmp.ne.s32.totalorder %s243, %s245
      %p252 = scmp.eq.s32.totalorder %s25, 1
      %p253 = por %p251, %p252
      %p254 = scmp.ne.s32.totalorder %s245, %s246
      %p255 = scmp.eq.s32.totalorder %s25, 0
      %p256 = por %p254, %p255
      %p257 = scmp.ne.s32.totalorder %s245, %s246
      %p258 = scmp.eq.s32.totalorder %s26, 1
      %p259 = por %p257, %p258
      %p261 = scmp.ne.s32.totalorder %s246, %s260
      %p262 = scmp.eq.s32.totalorder %s26, 0
      %p263 = por %p261, %p262
      %s264 = ssub.s32 %s20, %s27
      %p265 = scmp.eq.s32.totalorder %s264, 0
      %s267 = sadd.s32 %s266, 1
      %s268 = scalar_select %p265, %s266, %s267
      %p271 = pneg %p265
      %p272 = scmp.eq.s32.totalorder %s20, 1
      %p273 = por %p271, %p272
      %p274 = scmp.ne.s32.totalorder %s266, %s269
      %p275 = scmp.eq.s32.totalorder %s20, 0
      %p276 = por %p274, %p275
      %p277 = scmp.ne.s32.totalorder %s266, %s269
      %p278 = scmp.eq.s32.totalorder %s25, 1
      %p279 = por %p277, %p278
      %p280 = scmp.ne.s32.totalorder %s269, %s270
      %p281 = scmp.eq.s32.totalorder %s25, 0
      %p282 = por %p280, %p281
      %p283 = scmp.ne.s32.totalorder %s269, %s270
      %p284 = scmp.eq.s32.totalorder %s26, 1
      %p285 = por %p283, %p284
      %p287 = scmp.ne.s32.totalorder %s270, %s286
      %p288 = scmp.eq.s32.totalorder %s26, 0
      %p289 = por %p287, %p288
      %p290 = scmp.le.s32.totalorder 1, %s20
      %p291 = scmp.lt.s32.totalorder %s20, 3
      %p292 = pnand %p290, %p291
      %p293 = pneg %p292
      // Predicated region
      $region9: #{latent_attention_forward.1} parent=5 // pred_check
        _
      $region10: #{latent_attention_forward.1} parent=5 // pred_check_branch
        %295 = sbr.rel (%p292) target = $region12
      $region11: #{latent_attention_forward.1} parent=5 // pred_region
        %s296 = ssub.s32 %s20, 1
        // Predicated region
        $region13: #{latent_attention_forward.1} parent=11 // pred_check
          %p297 = pneg %p67
        $region14: #{latent_attention_forward.1} parent=11 // pred_check_branch
          %299 = sbr.rel (%p297) target = $region16
        $region15: #{latent_attention_forward.1} parent=11 // pred_region
          _
        $region16: #{latent_attention_forward.1} parent=11 // pred_fallthru
          _
        // Predicated region
        $region17: #{latent_attention_forward.1} parent=11 // pred_check
          %p300 = pneg %p88
        $region18: #{latent_attention_forward.1} parent=11 // pred_check_branch
          %302 = sbr.rel (%p300) target = $region20
        $region19: #{latent_attention_forward.1} parent=11 // pred_region
          _
        $region20: #{latent_attention_forward.1} parent=11 // pred_fallthru
          _
        // Predicated region
        $region21: #{latent_attention_forward.1} parent=11 // pred_check
          %p303 = pneg %p109
        $region22: #{latent_attention_forward.1} parent=11 // pred_check_branch
          %305 = sbr.rel (%p303) target = $region24
        $region23: #{latent_attention_forward.1} parent=11 // pred_region
          _
        $region24: #{latent_attention_forward.1} parent=11 // pred_fallthru
          _
        // Predicated region
        $region25: #{latent_attention_forward.1} parent=11 // pred_check
          %p306 = pneg %p130
        $region26: #{latent_attention_forward.1} parent=11 // pred_check_branch
          %308 = sbr.rel (%p306) target = $region28
        $region27: #{latent_attention_forward.1} parent=11 // pred_region
          _
        $region28: #{latent_attention_forward.1} parent=11 // pred_fallthru
          _
        // Predicated region
        $region29: #{latent_attention_forward.1} parent=11 // pred_check
          %p309 = pneg %p151
        $region30: #{latent_attention_forward.1} parent=11 // pred_check_branch
          %311 = sbr.rel (%p309) target = $region32
        $region31: #{latent_attention_forward.1} parent=11 // pred_region
          _
        $region32: #{latent_attention_forward.1} parent=11 // pred_fallthru
          _
        // Predicated region
        $region33: #{latent_attention_forward.1} parent=11 // pred_check
          %p312 = pneg %p172
        $region34: #{latent_attention_forward.1} parent=11 // pred_check_branch
          %314 = sbr.rel (%p312) target = $region36
        $region35: #{latent_attention_forward.1} parent=11 // pred_region
          _
        $region36: #{latent_attention_forward.1} parent=11 // pred_fallthru
          _
        // Predicated region
        $region37: #{latent_attention_forward.1} parent=11 // pred_check
          %p315 = pneg %p193
        $region38: #{latent_attention_forward.1} parent=11 // pred_check_branch
          %317 = sbr.rel (%p315) target = $region40
        $region39: #{latent_attention_forward.1} parent=11 // pred_region
          _
        $region40: #{latent_attention_forward.1} parent=11 // pred_fallthru
          _
        // Predicated region
        $region41: #{latent_attention_forward.1} parent=11 // pred_check
          %p318 = pneg %p214
        $region42: #{latent_attention_forward.1} parent=11 // pred_check_branch
          %320 = sbr.rel (%p318) target = $region44
        $region43: #{latent_attention_forward.1} parent=11 // pred_region
          _
        $region44: #{latent_attention_forward.1} parent=11 // pred_fallthru
          _
        // Predicated region
        $region45: #{latent_attention_forward.1} parent=11 // pred_check
          %p321 = pneg %p235
        $region46: #{latent_attention_forward.1} parent=11 // pred_check_branch
          %323 = sbr.rel (%p321) target = $region48
        $region47: #{latent_attention_forward.1} parent=11 // pred_region
          _
        $region48: #{latent_attention_forward.1} parent=11 // pred_fallthru
          _
        // Predicated region
        $region49: #{latent_attention_forward.1} parent=11 // pred_check
          %p324 = pneg %p256
        $region50: #{latent_attention_forward.1} parent=11 // pred_check_branch
          %326 = sbr.rel (%p324) target = $region52
        $region51: #{latent_attention_forward.1} parent=11 // pred_region
          _
        $region52: #{latent_attention_forward.1} parent=11 // pred_fallthru
          _
      $region12: #{latent_attention_forward.1} parent=5 // pred_fallthru
        _
      %p327 = scmp.lt.s32.totalorder %s20, 2
      // Predicated region
      $region53: #{latent_attention_forward.1} parent=5 // pred_check
        %p328 = pneg %p327
      $region54: #{latent_attention_forward.1} parent=5 // pred_check_branch
        %330 = sbr.rel (%p328) target = $region56
      $region55: #{latent_attention_forward.1} parent=5 // pred_region
        // Predicated region
        $region57: #{latent_attention_forward.1} parent=55 // pred_check
          %p331 = pneg %p40
        $region58: #{latent_attention_forward.1} parent=55 // pred_check_branch
          %333 = sbr.rel (%p331) target = $region60
        $region59: #{latent_attention_forward.1} parent=55 // pred_region
          %p334 = scmp.lt.s32.totalorder %s20, 1
          %s335 = scalar_select %p334, %s20, 1
          %s336 = smul.addr %s335, 4
          %s337 = scalar_lea.vmem %s0, %s336
        $region60: #{latent_attention_forward.1} parent=55 // pred_fallthru
          _
      $region56: #{latent_attention_forward.1} parent=5 // pred_fallthru
        _
      %p338 = scmp.le.s32.totalorder 1, %s20
      %p339 = scmp.lt.s32.totalorder %s20, 3
      %p340 = pnand %p338, %p339
      %p341 = pneg %p340
      // Predicated region
      $region61: #{latent_attention_forward.1} parent=5 // pred_check
        _
      $region62: #{latent_attention_forward.1} parent=5 // pred_check_branch
        %343 = sbr.rel (%p340) target = $region64
      $region63: #{latent_attention_forward.1} parent=5 // pred_region
        %s344 = ssub.s32 %s20, 1
        %p345 = scmp.lt.s32.totalorder %s25, 1
        %s346 = scalar_select %p345, %s25, 1
        %s347 = smul.addr %s346, 4
        %s348 = scalar_lea.vmem %s0, %s347
        %p349 = pneg %p46
        %p350 = pneg %p43
        %p351 = pneg %p67
        %p352 = pneg %p64
        %p353 = pneg %p88
        %p354 = pneg %p85
        %p355 = pneg %p109
        %p356 = pneg %p106
        %p357 = pneg %p130
        %p358 = pneg %p127
        %p359 = pneg %p151
        %p360 = pneg %p148
        %p361 = pneg %p172
        %p362 = pneg %p169
        %p363 = pneg %p193
        %p364 = pneg %p190
        %p365 = pneg %p214
        %p366 = pneg %p211
        %p367 = pneg %p235
        %p368 = pneg %p232
        %p369 = pneg %p256
        %p370 = pneg %p253
        %p371 = pneg %p282
        %p372 = pneg %p279
        %s373 = sand.u32 %s269, 1
        %s374 = scalar_lea.sflag [#allocation3], %s373
        %s375 = sand.u32 %s269, 1
        %s376 = scalar_lea.vmem [#allocation2], %s375
        %p377 = scmp.lt.s32.totalorder %s25, 1
        %s378 = scalar_select %p377, %s25, 1
        %s379 = smul.addr %s378, 4
        %s380 = scalar_lea.vmem %s0, %s379
        %v382 = vld [vmem:[%s380] sm:$0xf]
        %v383 = vld [vmem:[%s3] sm:$0xf]
        %v384 = vld [vmem:[%s3 + $0x4] sm:$0xf]
        %v385 = vld [vmem:[%s3 + $0x8] sm:$0xf]
        %v386 = vld [vmem:[%s3 + $0xc] sm:$0xf]
        %v387 = vld [vmem:[%s4] sm:$0xf]
        %v388 = vld [vmem:[%s4 + $0x4] sm:$0xf]
        %v389 = vld [vmem:[%s5] sm:$0xf]
        %v390 = vld [vmem:[%s5 + $0x4] sm:$0xf]
        %v391 = vld [vmem:[%s5 + $0x8] sm:$0xf]
        %v392 = vld [vmem:[%s5 + $0xc] sm:$0xf]
        %v393 = vld [vmem:[%s1] sm:$0xf]
        %v394 = vld [vmem:[%s1 + $0x4] sm:$0xf]
        %v395 = vld [vmem:[%s1 + $0x8] sm:$0xf]
        %v396 = vld [vmem:[%s1 + $0xc] sm:$0xf]
        %v397 = vld [vmem:[%s2] sm:$0x1]
        %v399 = vlaneseq
        %v400 = vshrl.u32 %v399, 7
        %v401 = vsub.s32 0, %v400
        %v402 = vrot.slane %v397, %v401
        %v408 = vunpack.c.l.b16 %v393
        %v409 = vunpack.c.l.b16 %v394
        %v410 = vunpack.c.l.b16 %v395
        %v411 = vunpack.c.l.b16 %v396
        %v412 = vpack.c.b16 %v409, %v408
        %v413 = vpack.c.b16 %v411, %v410
        %vm416 = vcmask 261120
        %v418 = vsel %vm416, %v382, 0
        %420 = vmatprep.subr.bf16.mxu0 0
        %421 = vmatpush1.bf16.msra.mxu0 0
        %422 = vmatprep.subr.bf16.mxu0 0
        %423 = vmatpush1.bf16.msra.mxu0 0
        %424 = vmatprep.subr.bf16.mxu0 0
        %425 = vmatpush1.bf16.msra.mxu0 0
        %426 = vmatprep.subr.bf16.mxu0 0
        %427 = vmatpush1.bf16.msra.mxu0 0
        %428 = vmatprep.subr.bf16.mxu0 0
        %429 = vmatpush1.bf16.msra.mxu0 0
        %430 = vmatprep.subr.bf16.mxu0 0
        %431 = vmatpush1.bf16.msra.mxu0 0
        %432 = vmatprep.subr.bf16.mxu0 0
        %433 = vmatpush1.bf16.msra.mxu0 %v413
        %434 = vmatprep.subr.bf16.mxu0 0
        %435 = vmatpush1.bf16.msra.mxu0 %v412
        %436 = vmatprep.subr.bf16.mxu0 0
        %437 = vmatpush2.bf16.msra.mxu0 0
        %438 = vmatprep.subr.bf16.mxu0 0
        %439 = vmatpush2.bf16.msra.mxu0 0
        %440 = vmatprep.subr.bf16.mxu0 0
        %441 = vmatpush2.bf16.msra.mxu0 0
        %442 = vmatprep.subr.bf16.mxu0 0
        %443 = vmatpush2.bf16.msra.mxu0 0
        %444 = vmatprep.subr.bf16.mxu0 0
        %445 = vmatpush2.bf16.msra.mxu0 0
        %446 = vmatprep.subr.bf16.mxu0 0
        %447 = vmatpush2.bf16.msra.mxu0 0
        %448 = vmatprep.subr.bf16.mxu0 0
        %449 = vmatpush2.bf16.msra.mxu0 0
        %450 = vmatprep.subr.bf16.mxu0 0
        %451 = vmatpush2.bf16.msra.mxu0 0
        %452 = vmatprep.mubr.bf16.mxu0 0
        %453 = vmatmul.mubr.bf16.gmra.mxu0 %v418
        %v454 = vpop.f32.mrf.mxu0
        %v455 = vadd.f32 %v402, %v454
        %v456 = vpop.f32.mrf.mxu0
        %v457 = vpop.f32.mrf.mxu0
        %v458 = vpop.f32.mrf.mxu0
        %459 = vdwg.mxu0
        %v460 = vpack.c.bf16 %v455, %v455
        %vm461 = vcmask 64512
        %v463 = vsel %vm461, %v460, 0
        %vm465 = vcmask 1043456
        %v467 = vsel %vm465, %v383, 0
        %469 = vmatprep.subr.bf16.mxu0 0
        %470 = vmatpush1.bf16.msra.mxu0 0
        %471 = vmatprep.subr.bf16.mxu0 0
        %472 = vmatpush1.bf16.msra.mxu0 0
        %473 = vmatprep.subr.bf16.mxu0 0
        %474 = vmatpush1.bf16.msra.mxu0 0
        %475 = vmatprep.subr.bf16.mxu0 0
        %476 = vmatpush1.bf16.msra.mxu0 0
        %477 = vmatprep.subr.bf16.mxu0 0
        %478 = vmatpush1.bf16.msra.mxu0 0
        %479 = vmatprep.subr.bf16.mxu0 0
        %480 = vmatpush1.bf16.msra.mxu0 0
        %481 = vmatprep.subr.bf16.mxu0 0
        %482 = vmatpush1.bf16.msra.mxu0 0
        %483 = vmatprep.subr.bf16.mxu0 0
        %484 = vmatpush1.bf16.msra.mxu0 %v467
        %485 = vmatprep.subr.bf16.mxu0 0
        %486 = vmatpush2.bf16.msra.mxu0 0
        %487 = vmatprep.subr.bf16.mxu0 0
        %488 = vmatpush2.bf16.msra.mxu0 0
        %489 = vmatprep.subr.bf16.mxu0 0
        %490 = vmatpush2.bf16.msra.mxu0 0
        %491 = vmatprep.subr.bf16.mxu0 0
        %492 = vmatpush2.bf16.msra.mxu0 0
        %493 = vmatprep.subr.bf16.mxu0 0
        %494 = vmatpush2.bf16.msra.mxu0 0
        %495 = vmatprep.subr.bf16.mxu0 0
        %496 = vmatpush2.bf16.msra.mxu0 0
        %497 = vmatprep.subr.bf16.mxu0 0
        %498 = vmatpush2.bf16.msra.mxu0 0
        %499 = vmatprep.subr.bf16.mxu0 0
        %500 = vmatpush2.bf16.msra.mxu0 0
        %501 = vmatprep.mubr.bf16.mxu0 0
        %502 = vmatmul.mubr.bf16.gmra.mxu0 %v463
        %v503 = vpop.f32.mrf.mxu0
        %v504 = vadd.f32 0.0, %v503
        %v505 = vpop.f32.mrf.mxu0
        %v506 = vpop.f32.mrf.mxu0
        %v507 = vpop.f32.mrf.mxu0
        %508 = vdwg.mxu0
        %vm509 = vcmask 130048
        %v510 = vsel %vm509, %v504, -inf
        %511 = vmax.xlane.f32.xlu0 %v510
        %v512 = vpop.xlane.xlu0 %511
        %v513 = vsub.f32 %v504, %v512
        %v514 = vmul.f32 %v513, 1.442695
        %v515 = vpow.pop %v514
        %v516 = vsel %vm509, %v515, 0.0
        %517 = vadd.xlane.f32.xlu0 %v516
        %v518 = vpop.xlane.xlu0 %517
        %v519 = vrcp.pop %v518
        %v520 = vmul.f32 %v515, %v519
        %v521 = vpack.c.bf16 %v520, %v520
        %v524 = vunpack.c.l.b16 %v387
        %v525 = vunpack.c.l.b16 %v388
        %v526 = vpack.c.b16 %v525, %v524
        %v529 = vsel %vm509, %v521, 0
        %531 = vmatprep.subr.bf16.mxu0 0
        %532 = vmatpush1.bf16.msra.mxu0 0
        %533 = vmatprep.subr.bf16.mxu0 0
        %534 = vmatpush1.bf16.msra.mxu0 0
        %535 = vmatprep.subr.bf16.mxu0 0
        %536 = vmatpush1.bf16.msra.mxu0 0
        %537 = vmatprep.subr.bf16.mxu0 0
        %538 = vmatpush1.bf16.msra.mxu0 0
        %539 = vmatprep.subr.bf16.mxu0 0
        %540 = vmatpush1.bf16.msra.mxu0 0
        %541 = vmatprep.subr.bf16.mxu0 0
        %542 = vmatpush1.bf16.msra.mxu0 0
        %543 = vmatprep.subr.bf16.mxu0 0
        %544 = vmatpush1.bf16.msra.mxu0 0
        %545 = vmatprep.subr.bf16.mxu0 0
        %546 = vmatpush1.bf16.msra.mxu0 %v526
        %547 = vmatprep.subr.bf16.mxu0 0
        %548 = vmatpush2.bf16.msra.mxu0 0
        %549 = vmatprep.subr.bf16.mxu0 0
        %550 = vmatpush2.bf16.msra.mxu0 0
        %551 = vmatprep.subr.bf16.mxu0 0
        %552 = vmatpush2.bf16.msra.mxu0 0
        %553 = vmatprep.subr.bf16.mxu0 0
        %554 = vmatpush2.bf16.msra.mxu0 0
        %555 = vmatprep.subr.bf16.mxu0 0
        %556 = vmatpush2.bf16.msra.mxu0 0
        %557 = vmatprep.subr.bf16.mxu0 0
        %558 = vmatpush2.bf16.msra.mxu0 0
        %559 = vmatprep.subr.bf16.mxu0 0
        %560 = vmatpush2.bf16.msra.mxu0 0
        %561 = vmatprep.subr.bf16.mxu0 0
        %562 = vmatpush2.bf16.msra.mxu0 0
        %563 = vmatprep.mubr.bf16.mxu0 0
        %564 = vmatmul.mubr.bf16.gmra.mxu0 %v529
        %v565 = vpop.f32.mrf.mxu0
        %v566 = vadd.f32 0.0, %v565
        %v567 = vpop.f32.mrf.mxu0
        %v568 = vpop.f32.mrf.mxu0
        %v569 = vpop.f32.mrf.mxu0
        %570 = vdwg.mxu0
        %v571 = vpack.c.bf16 %v566, %v566
        %573 = vrot.lane.b32.xlu0 %v460, 120
        %v574 = vpop.permute.xlu0 %573
        %v576 = vsel %vm461, %v574, 0
        %v579 = vsel %vm465, %v384, 0
        %581 = vmatprep.subr.bf16.mxu0 0
        %582 = vmatpush1.bf16.msra.mxu0 0
        %583 = vmatprep.subr.bf16.mxu0 0
        %584 = vmatpush1.bf16.msra.mxu0 0
        %585 = vmatprep.subr.bf16.mxu0 0
        %586 = vmatpush1.bf16.msra.mxu0 0
        %587 = vmatprep.subr.bf16.mxu0 0
        %588 = vmatpush1.bf16.msra.mxu0 0
        %589 = vmatprep.subr.bf16.mxu0 0
        %590 = vmatpush1.bf16.msra.mxu0 0
        %591 = vmatprep.subr.bf16.mxu0 0
        %592 = vmatpush1.bf16.msra.mxu0 0
        %593 = vmatprep.subr.bf16.mxu0 0
        %594 = vmatpush1.bf16.msra.mxu0 0
        %595 = vmatprep.subr.bf16.mxu0 0
        %596 = vmatpush1.bf16.msra.mxu0 %v579
        %597 = vmatprep.subr.bf16.mxu0 0
        %598 = vmatpush2.bf16.msra.mxu0 0
        %599 = vmatprep.subr.bf16.mxu0 0
        %600 = vmatpush2.bf16.msra.mxu0 0
        %601 = vmatprep.subr.bf16.mxu0 0
        %602 = vmatpush2.bf16.msra.mxu0 0
        %603 = vmatprep.subr.bf16.mxu0 0
        %604 = vmatpush2.bf16.msra.mxu0 0
        %605 = vmatprep.subr.bf16.mxu0 0
        %606 = vmatpush2.bf16.msra.mxu0 0
        %607 = vmatprep.subr.bf16.mxu0 0
        %608 = vmatpush2.bf16.msra.mxu0 0
        %609 = vmatprep.subr.bf16.mxu0 0
        %610 = vmatpush2.bf16.msra.mxu0 0
        %611 = vmatprep.subr.bf16.mxu0 0
        %612 = vmatpush2.bf16.msra.mxu0 0
        %613 = vmatprep.mubr.bf16.mxu0 0
        %614 = vmatmul.mubr.bf16.gmra.mxu0 %v576
        %v615 = vpop.f32.mrf.mxu0
        %v616 = vadd.f32 0.0, %v615
        %v617 = vpop.f32.mrf.mxu0
        %v618 = vpop.f32.mrf.mxu0
        %v619 = vpop.f32.mrf.mxu0
        %620 = vdwg.mxu0
        %v621 = vsel %vm509, %v616, -inf
        %622 = vmax.xlane.f32.xlu0 %v621
        %v623 = vpop.xlane.xlu0 %622
        %v624 = vsub.f32 %v616, %v623
        %v625 = vmul.f32 %v624, 1.442695
        %v626 = vpow.pop %v625
        %v627 = vsel %vm509, %v626, 0.0
        %628 = vadd.xlane.f32.xlu0 %v627
        %v629 = vpop.xlane.xlu0 %628
        %v630 = vrcp.pop %v629
        %v631 = vmul.f32 %v626, %v630
        %v632 = vpack.c.bf16 %v631, %v631
        %633 = vrot.lane.b32.xlu0 %v526, 120
        %v634 = vpop.permute.xlu0 %633
        %v637 = vsel %vm509, %v632, 0
        %639 = vmatprep.subr.bf16.mxu0 0
        %640 = vmatpush1.bf16.msra.mxu0 0
        %641 = vmatprep.subr.bf16.mxu0 0
        %642 = vmatpush1.bf16.msra.mxu0 0
        %643 = vmatprep.subr.bf16.mxu0 0
        %644 = vmatpush1.bf16.msra.mxu0 0
        %645 = vmatprep.subr.bf16.mxu0 0
        %646 = vmatpush1.bf16.msra.mxu0 0
        %647 = vmatprep.subr.bf16.mxu0 0
        %648 = vmatpush1.bf16.msra.mxu0 0
        %649 = vmatprep.subr.bf16.mxu0 0
        %650 = vmatpush1.bf16.msra.mxu0 0
        %651 = vmatprep.subr.bf16.mxu0 0
        %652 = vmatpush1.bf16.msra.mxu0 0
        %653 = vmatprep.subr.bf16.mxu0 0
        %654 = vmatpush1.bf16.msra.mxu0 %v634
        %655 = vmatprep.subr.bf16.mxu0 0
        %656 = vmatpush2.bf16.msra.mxu0 0
        %657 = vmatprep.subr.bf16.mxu0 0
        %658 = vmatpush2.bf16.msra.mxu0 0
        %659 = vmatprep.subr.bf16.mxu0 0
        %660 = vmatpush2.bf16.msra.mxu0 0
        %661 = vmatprep.subr.bf16.mxu0 0
        %662 = vmatpush2.bf16.msra.mxu0 0
        %663 = vmatprep.subr.bf16.mxu0 0
        %664 = vmatpush2.bf16.msra.mxu0 0
        %665 = vmatprep.subr.bf16.mxu0 0
        %666 = vmatpush2.bf16.msra.mxu0 0
        %667 = vmatprep.subr.bf16.mxu0 0
        %668 = vmatpush2.bf16.msra.mxu0 0
        %669 = vmatprep.subr.bf16.mxu0 0
        %670 = vmatpush2.bf16.msra.mxu0 0
        %671 = vmatprep.mubr.bf16.mxu0 0
        %672 = vmatmul.mubr.bf16.gmra.mxu0 %v637
        %v673 = vpop.f32.mrf.mxu0
        %v674 = vadd.f32 0.0, %v673
        %v675 = vpop.f32.mrf.mxu0
        %v676 = vpop.f32.mrf.mxu0
        %v677 = vpop.f32.mrf.mxu0
        %678 = vdwg.mxu0
        %v679 = vpack.c.bf16 %v674, %v674
        %v681 = vsel %vm461, %v679, 0
        %v684 = vsel %vm465, %v390, 0
        %686 = vmatprep.subr.bf16.mxu0 0
        %687 = vmatpush1.bf16.msra.mxu0 0
        %688 = vmatprep.subr.bf16.mxu0 0
        %689 = vmatpush1.bf16.msra.mxu0 0
        %690 = vmatprep.subr.bf16.mxu0 0
        %691 = vmatpush1.bf16.msra.mxu0 0
        %692 = vmatprep.subr.bf16.mxu0 0
        %693 = vmatpush1.bf16.msra.mxu0 0
        %694 = vmatprep.subr.bf16.mxu0 0
        %695 = vmatpush1.bf16.msra.mxu0 0
        %696 = vmatprep.subr.bf16.mxu0 0
        %697 = vmatpush1.bf16.msra.mxu0 0
        %698 = vmatprep.subr.bf16.mxu0 0
        %699 = vmatpush1.bf16.msra.mxu0 0
        %700 = vmatprep.subr.bf16.mxu0 0
        %701 = vmatpush1.bf16.msra.mxu0 %v684
        %702 = vmatprep.subr.bf16.mxu0 0
        %703 = vmatpush2.bf16.msra.mxu0 0
        %704 = vmatprep.subr.bf16.mxu0 0
        %705 = vmatpush2.bf16.msra.mxu0 0
        %706 = vmatprep.subr.bf16.mxu0 0
        %707 = vmatpush2.bf16.msra.mxu0 0
        %708 = vmatprep.subr.bf16.mxu0 0
        %709 = vmatpush2.bf16.msra.mxu0 0
        %710 = vmatprep.subr.bf16.mxu0 0
        %711 = vmatpush2.bf16.msra.mxu0 0
        %712 = vmatprep.subr.bf16.mxu0 0
        %713 = vmatpush2.bf16.msra.mxu0 0
        %714 = vmatprep.subr.bf16.mxu0 0
        %715 = vmatpush2.bf16.msra.mxu0 0
        %716 = vmatprep.subr.bf16.mxu0 0
        %717 = vmatpush2.bf16.msra.mxu0 0
        %718 = vmatprep.mubr.bf16.mxu0 0
        %719 = vmatmul.mubr.bf16.gmra.mxu0 %v681
        %v720 = vpop.f32.mrf.mxu0
        %v721 = vadd.f32 0.0, %v720
        %v722 = vpop.f32.mrf.mxu0
        %v723 = vpop.f32.mrf.mxu0
        %v724 = vpop.f32.mrf.mxu0
        %725 = vdwg.mxu0
        %v727 = vsel %vm461, %v571, 0
        %v730 = vsel %vm465, %v389, 0
        %732 = vmatprep.subr.bf16.mxu0 0
        %733 = vmatpush1.bf16.msra.mxu0 0
        %734 = vmatprep.subr.bf16.mxu0 0
        %735 = vmatpush1.bf16.msra.mxu0 0
        %736 = vmatprep.subr.bf16.mxu0 0
        %737 = vmatpush1.bf16.msra.mxu0 0
        %738 = vmatprep.subr.bf16.mxu0 0
        %739 = vmatpush1.bf16.msra.mxu0 0
        %740 = vmatprep.subr.bf16.mxu0 0
        %741 = vmatpush1.bf16.msra.mxu0 0
        %742 = vmatprep.subr.bf16.mxu0 0
        %743 = vmatpush1.bf16.msra.mxu0 0
        %744 = vmatprep.subr.bf16.mxu0 0
        %745 = vmatpush1.bf16.msra.mxu0 0
        %746 = vmatprep.subr.bf16.mxu0 0
        %747 = vmatpush1.bf16.msra.mxu0 %v730
        %748 = vmatprep.subr.bf16.mxu0 0
        %749 = vmatpush2.bf16.msra.mxu0 0
        %750 = vmatprep.subr.bf16.mxu0 0
        %751 = vmatpush2.bf16.msra.mxu0 0
        %752 = vmatprep.subr.bf16.mxu0 0
        %753 = vmatpush2.bf16.msra.mxu0 0
        %754 = vmatprep.subr.bf16.mxu0 0
        %755 = vmatpush2.bf16.msra.mxu0 0
        %756 = vmatprep.subr.bf16.mxu0 0
        %757 = vmatpush2.bf16.msra.mxu0 0
        %758 = vmatprep.subr.bf16.mxu0 0
        %759 = vmatpush2.bf16.msra.mxu0 0
        %760 = vmatprep.subr.bf16.mxu0 0
        %761 = vmatpush2.bf16.msra.mxu0 0
        %762 = vmatprep.subr.bf16.mxu0 0
        %763 = vmatpush2.bf16.msra.mxu0 0
        %764 = vmatprep.mubr.bf16.mxu0 0
        %765 = vmatmul.mubr.bf16.gmra.mxu0 %v727
        %v766 = vpop.f32.mrf.mxu0
        %v767 = vadd.f32 %v721, %v766
        %v768 = vpop.f32.mrf.mxu0
        %v769 = vpop.f32.mrf.mxu0
        %v770 = vpop.f32.mrf.mxu0
        %771 = vdwg.mxu0
        %772 = vrot.lane.b32.xlu0 %v460, 112
        %v773 = vpop.permute.xlu0 %772
        %v775 = vsel %vm461, %v773, 0
        %v778 = vsel %vm465, %v385, 0
        %780 = vmatprep.subr.bf16.mxu0 0
        %781 = vmatpush1.bf16.msra.mxu0 0
        %782 = vmatprep.subr.bf16.mxu0 0
        %783 = vmatpush1.bf16.msra.mxu0 0
        %784 = vmatprep.subr.bf16.mxu0 0
        %785 = vmatpush1.bf16.msra.mxu0 0
        %786 = vmatprep.subr.bf16.mxu0 0
        %787 = vmatpush1.bf16.msra.mxu0 0
        %788 = vmatprep.subr.bf16.mxu0 0
        %789 = vmatpush1.bf16.msra.mxu0 0
        %790 = vmatprep.subr.bf16.mxu0 0
        %791 = vmatpush1.bf16.msra.mxu0 0
        %792 = vmatprep.subr.bf16.mxu0 0
        %793 = vmatpush1.bf16.msra.mxu0 0
        %794 = vmatprep.subr.bf16.mxu0 0
        %795 = vmatpush1.bf16.msra.mxu0 %v778
        %796 = vmatprep.subr.bf16.mxu0 0
        %797 = vmatpush2.bf16.msra.mxu0 0
        %798 = vmatprep.subr.bf16.mxu0 0
        %799 = vmatpush2.bf16.msra.mxu0 0
        %800 = vmatprep.subr.bf16.mxu0 0
        %801 = vmatpush2.bf16.msra.mxu0 0
        %802 = vmatprep.subr.bf16.mxu0 0
        %803 = vmatpush2.bf16.msra.mxu0 0
        %804 = vmatprep.subr.bf16.mxu0 0
        %805 = vmatpush2.bf16.msra.mxu0 0
        %806 = vmatprep.subr.bf16.mxu0 0
        %807 = vmatpush2.bf16.msra.mxu0 0
        %808 = vmatprep.subr.bf16.mxu0 0
        %809 = vmatpush2.bf16.msra.mxu0 0
        %810 = vmatprep.subr.bf16.mxu0 0
        %811 = vmatpush2.bf16.msra.mxu0 0
        %812 = vmatprep.mubr.bf16.mxu0 0
        %813 = vmatmul.mubr.bf16.gmra.mxu0 %v775
        %v814 = vpop.f32.mrf.mxu0
        %v815 = vadd.f32 0.0, %v814
        %v816 = vpop.f32.mrf.mxu0
        %v817 = vpop.f32.mrf.mxu0
        %v818 = vpop.f32.mrf.mxu0
        %819 = vdwg.mxu0
        %v820 = vsel %vm509, %v815, -inf
        %821 = vmax.xlane.f32.xlu0 %v820
        %v822 = vpop.xlane.xlu0 %821
        %v823 = vsub.f32 %v815, %v822
        %v824 = vmul.f32 %v823, 1.442695
        %v825 = vpow.pop %v824
        %v826 = vsel %vm509, %v825, 0.0
        %827 = vadd.xlane.f32.xlu0 %v826
        %v828 = vpop.xlane.xlu0 %827
        %v829 = vrcp.pop %v828
        %v830 = vmul.f32 %v825, %v829
        %v831 = vpack.c.bf16 %v830, %v830
        %832 = vrot.lane.b32.xlu0 %v526, 112
        %v833 = vpop.permute.xlu0 %832
        %v836 = vsel %vm509, %v831, 0
        %838 = vmatprep.subr.bf16.mxu0 0
        %839 = vmatpush1.bf16.msra.mxu0 0
        %840 = vmatprep.subr.bf16.mxu0 0
        %841 = vmatpush1.bf16.msra.mxu0 0
        %842 = vmatprep.subr.bf16.mxu0 0
        %843 = vmatpush1.bf16.msra.mxu0 0
        %844 = vmatprep.subr.bf16.mxu0 0
        %845 = vmatpush1.bf16.msra.mxu0 0
        %846 = vmatprep.subr.bf16.mxu0 0
        %847 = vmatpush1.bf16.msra.mxu0 0
        %848 = vmatprep.subr.bf16.mxu0 0
        %849 = vmatpush1.bf16.msra.mxu0 0
        %850 = vmatprep.subr.bf16.mxu0 0
        %851 = vmatpush1.bf16.msra.mxu0 0
        %852 = vmatprep.subr.bf16.mxu0 0
        %853 = vmatpush1.bf16.msra.mxu0 %v833
        %854 = vmatprep.subr.bf16.mxu0 0
        %855 = vmatpush2.bf16.msra.mxu0 0
        %856 = vmatprep.subr.bf16.mxu0 0
        %857 = vmatpush2.bf16.msra.mxu0 0
        %858 = vmatprep.subr.bf16.mxu0 0
        %859 = vmatpush2.bf16.msra.mxu0 0
        %860 = vmatprep.subr.bf16.mxu0 0
        %861 = vmatpush2.bf16.msra.mxu0 0
        %862 = vmatprep.subr.bf16.mxu0 0
        %863 = vmatpush2.bf16.msra.mxu0 0
        %864 = vmatprep.subr.bf16.mxu0 0
        %865 = vmatpush2.bf16.msra.mxu0 0
        %866 = vmatprep.subr.bf16.mxu0 0
        %867 = vmatpush2.bf16.msra.mxu0 0
        %868 = vmatprep.subr.bf16.mxu0 0
        %869 = vmatpush2.bf16.msra.mxu0 0
        %870 = vmatprep.mubr.bf16.mxu0 0
        %871 = vmatmul.mubr.bf16.gmra.mxu0 %v836
        %v872 = vpop.f32.mrf.mxu0
        %v873 = vadd.f32 0.0, %v872
        %v874 = vpop.f32.mrf.mxu0
        %v875 = vpop.f32.mrf.mxu0
        %v876 = vpop.f32.mrf.mxu0
        %877 = vdwg.mxu0
        %v878 = vpack.c.bf16 %v873, %v873
        %v880 = vsel %vm461, %v878, 0
        %v883 = vsel %vm465, %v391, 0
        %885 = vmatprep.subr.bf16.mxu0 0
        %886 = vmatpush1.bf16.msra.mxu0 0
        %887 = vmatprep.subr.bf16.mxu0 0
        %888 = vmatpush1.bf16.msra.mxu0 0
        %889 = vmatprep.subr.bf16.mxu0 0
        %890 = vmatpush1.bf16.msra.mxu0 0
        %891 = vmatprep.subr.bf16.mxu0 0
        %892 = vmatpush1.bf16.msra.mxu0 0
        %893 = vmatprep.subr.bf16.mxu0 0
        %894 = vmatpush1.bf16.msra.mxu0 0
        %895 = vmatprep.subr.bf16.mxu0 0
        %896 = vmatpush1.bf16.msra.mxu0 0
        %897 = vmatprep.subr.bf16.mxu0 0
        %898 = vmatpush1.bf16.msra.mxu0 0
        %899 = vmatprep.subr.bf16.mxu0 0
        %900 = vmatpush1.bf16.msra.mxu0 %v883
        %901 = vmatprep.subr.bf16.mxu0 0
        %902 = vmatpush2.bf16.msra.mxu0 0
        %903 = vmatprep.subr.bf16.mxu0 0
        %904 = vmatpush2.bf16.msra.mxu0 0
        %905 = vmatprep.subr.bf16.mxu0 0
        %906 = vmatpush2.bf16.msra.mxu0 0
        %907 = vmatprep.subr.bf16.mxu0 0
        %908 = vmatpush2.bf16.msra.mxu0 0
        %909 = vmatprep.subr.bf16.mxu0 0
        %910 = vmatpush2.bf16.msra.mxu0 0
        %911 = vmatprep.subr.bf16.mxu0 0
        %912 = vmatpush2.bf16.msra.mxu0 0
        %913 = vmatprep.subr.bf16.mxu0 0
        %914 = vmatpush2.bf16.msra.mxu0 0
        %915 = vmatprep.subr.bf16.mxu0 0
        %916 = vmatpush2.bf16.msra.mxu0 0
        %917 = vmatprep.mubr.bf16.mxu0 0
        %918 = vmatmul.mubr.bf16.gmra.mxu0 %v880
        %v919 = vpop.f32.mrf.mxu0
        %v920 = vadd.f32 0.0, %v919
        %v921 = vpop.f32.mrf.mxu0
        %v922 = vpop.f32.mrf.mxu0
        %v923 = vpop.f32.mrf.mxu0
        %924 = vdwg.mxu0
        %v925 = vadd.f32 %v767, %v920
        %926 = vrot.lane.b32.xlu0 %v460, 104
        %v927 = vpop.permute.xlu0 %926
        %v929 = vsel %vm461, %v927, 0
        %v932 = vsel %vm465, %v386, 0
        %934 = vmatprep.subr.bf16.mxu0 0
        %935 = vmatpush1.bf16.msra.mxu0 0
        %936 = vmatprep.subr.bf16.mxu0 0
        %937 = vmatpush1.bf16.msra.mxu0 0
        %938 = vmatprep.subr.bf16.mxu0 0
        %939 = vmatpush1.bf16.msra.mxu0 0
        %940 = vmatprep.subr.bf16.mxu0 0
        %941 = vmatpush1.bf16.msra.mxu0 0
        %942 = vmatprep.subr.bf16.mxu0 0
        %943 = vmatpush1.bf16.msra.mxu0 0
        %944 = vmatprep.subr.bf16.mxu0 0
        %945 = vmatpush1.bf16.msra.mxu0 0
        %946 = vmatprep.subr.bf16.mxu0 0
        %947 = vmatpush1.bf16.msra.mxu0 0
        %948 = vmatprep.subr.bf16.mxu0 0
        %949 = vmatpush1.bf16.msra.mxu0 %v932
        %950 = vmatprep.subr.bf16.mxu0 0
        %951 = vmatpush2.bf16.msra.mxu0 0
        %952 = vmatprep.subr.bf16.mxu0 0
        %953 = vmatpush2.bf16.msra.mxu0 0
        %954 = vmatprep.subr.bf16.mxu0 0
        %955 = vmatpush2.bf16.msra.mxu0 0
        %956 = vmatprep.subr.bf16.mxu0 0
        %957 = vmatpush2.bf16.msra.mxu0 0
        %958 = vmatprep.subr.bf16.mxu0 0
        %959 = vmatpush2.bf16.msra.mxu0 0
        %960 = vmatprep.subr.bf16.mxu0 0
        %961 = vmatpush2.bf16.msra.mxu0 0
        %962 = vmatprep.subr.bf16.mxu0 0
        %963 = vmatpush2.bf16.msra.mxu0 0
        %964 = vmatprep.subr.bf16.mxu0 0
        %965 = vmatpush2.bf16.msra.mxu0 0
        %966 = vmatprep.mubr.bf16.mxu0 0
        %967 = vmatmul.mubr.bf16.gmra.mxu0 %v929
        %v968 = vpop.f32.mrf.mxu0
        %v969 = vadd.f32 0.0, %v968
        %v970 = vpop.f32.mrf.mxu0
        %v971 = vpop.f32.mrf.mxu0
        %v972 = vpop.f32.mrf.mxu0
        %973 = vdwg.mxu0
        %v974 = vsel %vm509, %v969, -inf
        %975 = vmax.xlane.f32.xlu0 %v974
        %v976 = vpop.xlane.xlu0 %975
        %v977 = vsub.f32 %v969, %v976
        %v978 = vmul.f32 %v977, 1.442695
        %v979 = vpow.pop %v978
        %v980 = vsel %vm509, %v979, 0.0
        %981 = vadd.xlane.f32.xlu0 %v980
        %v982 = vpop.xlane.xlu0 %981
        %v983 = vrcp.pop %v982
        %v984 = vmul.f32 %v979, %v983
        %v985 = vpack.c.bf16 %v984, %v984
        %986 = vrot.lane.b32.xlu0 %v526, 104
        %v987 = vpop.permute.xlu0 %986
        %v990 = vsel %vm509, %v985, 0
        %992 = vmatprep.subr.bf16.mxu0 0
        %993 = vmatpush1.bf16.msra.mxu0 0
        %994 = vmatprep.subr.bf16.mxu0 0
        %995 = vmatpush1.bf16.msra.mxu0 0
        %996 = vmatprep.subr.bf16.mxu0 0
        %997 = vmatpush1.bf16.msra.mxu0 0
        %998 = vmatprep.subr.bf16.mxu0 0
        %999 = vmatpush1.bf16.msra.mxu0 0
        %1000 = vmatprep.subr.bf16.mxu0 0
        %1001 = vmatpush1.bf16.msra.mxu0 0
        %1002 = vmatprep.subr.bf16.mxu0 0
        %1003 = vmatpush1.bf16.msra.mxu0 0
        %1004 = vmatprep.subr.bf16.mxu0 0
        %1005 = vmatpush1.bf16.msra.mxu0 0
        %1006 = vmatprep.subr.bf16.mxu0 0
        %1007 = vmatpush1.bf16.msra.mxu0 %v987
        %1008 = vmatprep.subr.bf16.mxu0 0
        %1009 = vmatpush2.bf16.msra.mxu0 0
        %1010 = vmatprep.subr.bf16.mxu0 0
        %1011 = vmatpush2.bf16.msra.mxu0 0
        %1012 = vmatprep.subr.bf16.mxu0 0
        %1013 = vmatpush2.bf16.msra.mxu0 0
        %1014 = vmatprep.subr.bf16.mxu0 0
        %1015 = vmatpush2.bf16.msra.mxu0 0
        %1016 = vmatprep.subr.bf16.mxu0 0
        %1017 = vmatpush2.bf16.msra.mxu0 0
        %1018 = vmatprep.subr.bf16.mxu0 0
        %1019 = vmatpush2.bf16.msra.mxu0 0
        %1020 = vmatprep.subr.bf16.mxu0 0
        %1021 = vmatpush2.bf16.msra.mxu0 0
        %1022 = vmatprep.subr.bf16.mxu0 0
        %1023 = vmatpush2.bf16.msra.mxu0 0
        %1024 = vmatprep.mubr.bf16.mxu0 0
        %1025 = vmatmul.mubr.bf16.gmra.mxu0 %v990
        %v1026 = vpop.f32.mrf.mxu0
        %v1027 = vadd.f32 0.0, %v1026
        %v1028 = vpop.f32.mrf.mxu0
        %v1029 = vpop.f32.mrf.mxu0
        %v1030 = vpop.f32.mrf.mxu0
        %1031 = vdwg.mxu0
        %v1032 = vpack.c.bf16 %v1027, %v1027
        %v1034 = vsel %vm461, %v1032, 0
        %v1037 = vsel %vm465, %v392, 0
        %1039 = vmatprep.subr.bf16.mxu0 0
        %1040 = vmatpush1.bf16.msra.mxu0 0
        %1041 = vmatprep.subr.bf16.mxu0 0
        %1042 = vmatpush1.bf16.msra.mxu0 0
        %1043 = vmatprep.subr.bf16.mxu0 0
        %1044 = vmatpush1.bf16.msra.mxu0 0
        %1045 = vmatprep.subr.bf16.mxu0 0
        %1046 = vmatpush1.bf16.msra.mxu0 0
        %1047 = vmatprep.subr.bf16.mxu0 0
        %1048 = vmatpush1.bf16.msra.mxu0 0
        %1049 = vmatprep.subr.bf16.mxu0 0
        %1050 = vmatpush1.bf16.msra.mxu0 0
        %1051 = vmatprep.subr.bf16.mxu0 0
        %1052 = vmatpush1.bf16.msra.mxu0 0
        %1053 = vmatprep.subr.bf16.mxu0 0
        %1054 = vmatpush1.bf16.msra.mxu0 %v1037
        %1055 = vmatprep.subr.bf16.mxu0 0
        %1056 = vmatpush2.bf16.msra.mxu0 0
        %1057 = vmatprep.subr.bf16.mxu0 0
        %1058 = vmatpush2.bf16.msra.mxu0 0
        %1059 = vmatprep.subr.bf16.mxu0 0
        %1060 = vmatpush2.bf16.msra.mxu0 0
        %1061 = vmatprep.subr.bf16.mxu0 0
        %1062 = vmatpush2.bf16.msra.mxu0 0
        %1063 = vmatprep.subr.bf16.mxu0 0
        %1064 = vmatpush2.bf16.msra.mxu0 0
        %1065 = vmatprep.subr.bf16.mxu0 0
        %1066 = vmatpush2.bf16.msra.mxu0 0
        %1067 = vmatprep.subr.bf16.mxu0 0
        %1068 = vmatpush2.bf16.msra.mxu0 0
        %1069 = vmatprep.subr.bf16.mxu0 0
        %1070 = vmatpush2.bf16.msra.mxu0 0
        %1071 = vmatprep.mubr.bf16.mxu0 0
        %1072 = vmatmul.mubr.bf16.gmra.mxu0 %v1034
        %v1073 = vpop.f32.mrf.mxu0
        %v1074 = vadd.f32 0.0, %v1073
        %v1075 = vpop.f32.mrf.mxu0
        %v1076 = vpop.f32.mrf.mxu0
        %v1077 = vpop.f32.mrf.mxu0
        %1078 = vdwg.mxu0
        %v1079 = vadd.f32 %v925, %v1074
        %v1080 = vld [vmem:[%s6] sm:$0x1]
        %v1082 = vlaneseq
        %v1083 = vshrl.u32 %v1082, 7
        %v1084 = vsub.s32 0, %v1083
        %v1085 = vrot.slane %v1080, %v1084
        %v1087 = vadd.f32 %v1079, %v1085
        %v1088 = vpack.c.bf16 %v1087, %v1087
        %v1089 = vld [vmem:[%s7] sm:$0xf]
        %v1090 = vld [vmem:[%s7 + $0x4] sm:$0xf]
        %v1091 = vld [vmem:[%s7 + $0x8] sm:$0xf]
        %v1092 = vld [vmem:[%s7 + $0xc] sm:$0xf]
        %v1093 = vld [vmem:[%s8] sm:$0x1]
        %v1095 = vlaneseq
        %v1096 = vshrl.u32 %v1095, 7
        %v1097 = vsub.s32 0, %v1096
        %v1098 = vrot.slane %v1093, %v1097
        %v1104 = vunpack.c.l.b16 %v1089
        %v1105 = vunpack.c.l.b16 %v1090
        %v1106 = vunpack.c.l.b16 %v1091
        %v1107 = vunpack.c.l.b16 %v1092
        %v1108 = vpack.c.b16 %v1105, %v1104
        %v1109 = vpack.c.b16 %v1107, %v1106
        %v1113 = vsel %vm416, %v1088, 0
        %1115 = vmatprep.subr.bf16.mxu0 0
        %1116 = vmatpush1.bf16.msra.mxu0 0
        %1117 = vmatprep.subr.bf16.mxu0 0
        %1118 = vmatpush1.bf16.msra.mxu0 0
        %1119 = vmatprep.subr.bf16.mxu0 0
        %1120 = vmatpush1.bf16.msra.mxu0 0
        %1121 = vmatprep.subr.bf16.mxu0 0
        %1122 = vmatpush1.bf16.msra.mxu0 0
        %1123 = vmatprep.subr.bf16.mxu0 0
        %1124 = vmatpush1.bf16.msra.mxu0 0
        %1125 = vmatprep.subr.bf16.mxu0 0
        %1126 = vmatpush1.bf16.msra.mxu0 0
        %1127 = vmatprep.subr.bf16.mxu0 0
        %1128 = vmatpush1.bf16.msra.mxu0 %v1109
        %1129 = vmatprep.subr.bf16.mxu0 0
        %1130 = vmatpush1.bf16.msra.mxu0 %v1108
        %1131 = vmatprep.subr.bf16.mxu0 0
        %1132 = vmatpush2.bf16.msra.mxu0 0
        %1133 = vmatprep.subr.bf16.mxu0 0
        %1134 = vmatpush2.bf16.msra.mxu0 0
        %1135 = vmatprep.subr.bf16.mxu0 0
        %1136 = vmatpush2.bf16.msra.mxu0 0
        %1137 = vmatprep.subr.bf16.mxu0 0
        %1138 = vmatpush2.bf16.msra.mxu0 0
        %1139 = vmatprep.subr.bf16.mxu0 0
        %1140 = vmatpush2.bf16.msra.mxu0 0
        %1141 = vmatprep.subr.bf16.mxu0 0
        %1142 = vmatpush2.bf16.msra.mxu0 0
        %1143 = vmatprep.subr.bf16.mxu0 0
        %1144 = vmatpush2.bf16.msra.mxu0 0
        %1145 = vmatprep.subr.bf16.mxu0 0
        %1146 = vmatpush2.bf16.msra.mxu0 0
        %1147 = vmatprep.mubr.bf16.mxu0 0
        %1148 = vmatmul.mubr.bf16.gmra.mxu0 %v1113
        %v1149 = vpop.f32.mrf.mxu0
        %v1150 = vadd.f32 %v1098, %v1149
        %v1151 = vpop.f32.mrf.mxu0
        %v1152 = vpop.f32.mrf.mxu0
        %v1153 = vpop.f32.mrf.mxu0
        %1154 = vdwg.mxu0
        %v1155 = vmul.f32 %v1150, 0.5
        %v1156 = vmul.f32 %v1150, %v1150
        %v1157 = vmul.f32 %v1156, %v1150
        %v1158 = vmul.f32 %v1157, 0.044715
        %v1159 = vadd.f32 %v1150, %v1158
        %v1160 = vmul.f32 %v1159, 0.7978846
        %v1161 = vtanh.pop %v1160
        %v1162 = vadd.f32 %v1161, 1.0
        %v1163 = vmul.f32 %v1155, %v1162
        %v1164 = vpack.c.bf16 %v1163, %v1163
        %v1165 = vld [vmem:[%s9] sm:$0xf]
        %v1166 = vld [vmem:[%s9 + $0x4] sm:$0xf]
        %v1167 = vld [vmem:[%s9 + $0x8] sm:$0xf]
        %v1168 = vld [vmem:[%s9 + $0xc] sm:$0xf]
        %v1169 = vld [vmem:[%s9 + $0x10] sm:$0xf]
        %v1170 = vld [vmem:[%s9 + $0x14] sm:$0xf]
        %v1171 = vld [vmem:[%s9 + $0x18] sm:$0xf]
        %v1172 = vld [vmem:[%s9 + $0x1c] sm:$0xf]
        %v1173 = vld [vmem:[%s10] sm:$0x1]
        %v1175 = vlaneseq
        %v1176 = vshrl.u32 %v1175, 7
        %v1177 = vsub.s32 0, %v1176
        %v1178 = vrot.slane %v1173, %v1177
        %v1188 = vunpack.c.l.b16 %v1165
        %v1189 = vunpack.c.l.b16 %v1166
        %v1190 = vunpack.c.l.b16 %v1167
        %v1191 = vunpack.c.l.b16 %v1168
        %v1192 = vunpack.c.l.b16 %v1169
        %v1193 = vunpack.c.l.b16 %v1170
        %v1194 = vunpack.c.l.b16 %v1171
        %v1195 = vunpack.c.l.b16 %v1172
        %v1196 = vpack.c.b16 %v1189, %v1188
        %v1197 = vpack.c.b16 %v1191, %v1190
        %v1198 = vpack.c.b16 %v1193, %v1192
        %v1199 = vpack.c.b16 %v1195, %v1194
        %vm1204 = vcmask 523264
        %v1206 = vsel %vm1204, %v1164, 0
        %1208 = vmatprep.subr.bf16.mxu0 0
        %1209 = vmatpush1.bf16.msra.mxu0 0
        %1210 = vmatprep.subr.bf16.mxu0 0
        %1211 = vmatpush1.bf16.msra.mxu0 0
        %1212 = vmatprep.subr.bf16.mxu0 0
        %1213 = vmatpush1.bf16.msra.mxu0 0
        %1214 = vmatprep.subr.bf16.mxu0 0
        %1215 = vmatpush1.bf16.msra.mxu0 0
        %1216 = vmatprep.subr.bf16.mxu0 0
        %1217 = vmatpush1.bf16.msra.mxu0 %v1199
        %1218 = vmatprep.subr.bf16.mxu0 0
        %1219 = vmatpush1.bf16.msra.mxu0 %v1198
        %1220 = vmatprep.subr.bf16.mxu0 0
        %1221 = vmatpush1.bf16.msra.mxu0 %v1197
        %1222 = vmatprep.subr.bf16.mxu0 0
        %1223 = vmatpush1.bf16.msra.mxu0 %v1196
        %1224 = vmatprep.subr.bf16.mxu0 0
        %1225 = vmatpush2.bf16.msra.mxu0 0
        %1226 = vmatprep.subr.bf16.mxu0 0
        %1227 = vmatpush2.bf16.msra.mxu0 0
        %1228 = vmatprep.subr.bf16.mxu0 0
        %1229 = vmatpush2.bf16.msra.mxu0 0
        %1230 = vmatprep.subr.bf16.mxu0 0
        %1231 = vmatpush2.bf16.msra.mxu0 0
        %1232 = vmatprep.subr.bf16.mxu0 0
        %1233 = vmatpush2.bf16.msra.mxu0 0
        %1234 = vmatprep.subr.bf16.mxu0 0
        %1235 = vmatpush2.bf16.msra.mxu0 0
        %1236 = vmatprep.subr.bf16.mxu0 0
        %1237 = vmatpush2.bf16.msra.mxu0 0
        %1238 = vmatprep.subr.bf16.mxu0 0
        %1239 = vmatpush2.bf16.msra.mxu0 0
        %1240 = vmatprep.mubr.bf16.mxu0 0
        %1241 = vmatmul.mubr.bf16.gmra.mxu0 %v1206
        %v1242 = vpop.f32.mrf.mxu0
        %v1243 = vadd.f32 %v1178, %v1242
        %v1244 = vpop.f32.mrf.mxu0
        %v1245 = vpop.f32.mrf.mxu0
        %v1246 = vpop.f32.mrf.mxu0
        %1247 = vdwg.mxu0
        %v1248 = vrot.slane %v1243, 4
        %v1249 = vadd.f32 %v1243, %v1248
        %v1250 = vrot.slane %v1249, 2
        %v1251 = vadd.f32 %v1249, %v1250
        %v1252 = vrot.slane %v1251, 1
        %v1253 = vadd.f32 %v1251, %v1252
        %v1254 = vmul.f32 %v1253, 0.125
        %1255 = vst [vmem:[%s376] sm:$0x1] %v1254
        %s1256 = sand.u32 %s269, 1
        %s1257 = scalar_lea.sflag [#allocation3], %s1256
        %s1258 = sand.u32 %s269, 1
        %s1259 = scalar_lea.vmem [#allocation2], %s1258
        // Predicated region
        $region65: #{latent_attention_forward.1} parent=63 // pred_check
          %p1260 = pneg %p279
        $region66: #{latent_attention_forward.1} parent=63 // pred_check_branch
          %1262 = sbr.rel (%p1260) target = $region68
        $region67: #{latent_attention_forward.1} parent=63 // pred_region
          %s1264 = ssub.s32 16, 16
          %1265 = vsyncadd %s1257, %s1264
          %s1266 = smul.addr %s25, 16
          %s1267 = scalar_lea.hbm %s11, %s1266
          %s1269 = sshll.u32 %s1259, 4
          %s1270 = int_to_ptr.vmem [resolvable:$true] %s1269
          %1272 = dma.vmem_to_hbm [thread:$0]  %s1270, 16, %s1267, %s1257
        $region68: #{latent_attention_forward.1} parent=63 // pred_fallthru
          _
      $region64: #{latent_attention_forward.1} parent=5 // pred_fallthru
        _
      %p1273 = scmp.le.s32.totalorder 2, %s20
      // Predicated region
      $region69: #{latent_attention_forward.1} parent=5 // pred_check
        %p1274 = pneg %p1273
      $region70: #{latent_attention_forward.1} parent=5 // pred_check_branch
        %1276 = sbr.rel (%p1274) target = $region72
      $region71: #{latent_attention_forward.1} parent=5 // pred_region
        %s1277 = ssub.s32 %s20, 2
        // Predicated region
        $region73: #{latent_attention_forward.1} parent=71 // pred_check
          %p1278 = pneg %p285
        $region74: #{latent_attention_forward.1} parent=71 // pred_check_branch
          %1280 = sbr.rel (%p1278) target = $region76
        $region75: #{latent_attention_forward.1} parent=71 // pred_region
          %s1281 = sand.u32 %s270, 1
          %s1282 = scalar_lea.sflag [#allocation3], %s1281
          %s1283 = sand.u32 %s270, 1
          %s1284 = scalar_lea.vmem [#allocation2], %s1283
          %1285 = dma.done %s1282, 16
        $region76: #{latent_attention_forward.1} parent=71 // pred_fallthru
          _
      $region72: #{latent_attention_forward.1} parent=5 // pred_fallthru
        _
    $region6: #{latent_attention_forward.1} parent=1 // loop_footer
      %s24 = sadd.s32 1, %s20
    $region7: #{latent_attention_forward.1} parent=1 // loop_footer_branch
      %19 = sbr.rel target = $region3
    $region8: #{latent_attention_forward.1} parent=1 // loop_exit
      _
    %1286 = vsyncpa [#allocation3], 1
    %s1287 = scalar_lea.sflag [#allocation3], 1
    %1288 = vsyncpa %s1287, 1

</llo_original>
